<compile_context>
chip_gen: v7x
topology: tpu7x:2x2x1
jax: 0.10.0
libtpu: 0.0.40
codegen_flags: <defaults>
</compile_context>

<pallas_src>
import functools
import math

import jax
import jax.numpy as jnp
from jax import lax
from jax.experimental import pallas as pl
from jax.experimental.pallas import tpu as pltpu


# ----------------------------- stage 1: fused Q/K/V projections ---------------------------

def qkv_proj_kernel(q_ref, k_ref, v_ref,
                    wq_ref, bq_ref, wk_ref, bk_ref, wv_ref, bv_ref,
                    qp_ref, kp_ref, vp_ref, *, q_scale):
    q = q_ref[0]            # (Tm, D)
    k = k_ref[0]
    v = v_ref[0]
    # 1/sqrt(d_k) folded into projected Q (applied once per row, not per score tile).
    qp_ref[0] = ((jnp.dot(q, wq_ref[...], preferred_element_type=jnp.float32)
                  + bq_ref[...]) * q_scale).astype(qp_ref.dtype)
    kp_ref[0] = (jnp.dot(k, wk_ref[...], preferred_element_type=jnp.float32)
                 + bk_ref[...]).astype(kp_ref.dtype)
    vp_ref[0] = (jnp.dot(v, wv_ref[...], preferred_element_type=jnp.float32)
                 + bv_ref[...]).astype(vp_ref.dtype)


# --------------------- stage 2: flash attention + fused output projection -----------------

def flash_mha_kernel(qp_ref, kp_ref, vp_ref, mask_ref, wo_ref, bo_ref,
                     o_ref, m_sc, l_sc, acc_sc, heads_sc):
    ki = pl.program_id(2)
    nk = pl.num_programs(2)
    H, Tq, d_k = acc_sc.shape

    @pl.when(ki == 0)
    def _init():
        m_sc[...] = jnp.full(m_sc.shape, -jnp.inf, m_sc.dtype)
        l_sc[...] = jnp.zeros(l_sc.shape, l_sc.dtype)
        acc_sc[...] = jnp.zeros(acc_sc.shape, acc_sc.dtype)

    qp = qp_ref[0].astype(jnp.float32)     # (Tq, D)  projected, pre-scaled Q (lane-fused heads)
    kp = kp_ref[0].astype(jnp.float32)     # (Tk, D)
    vp = vp_ref[0].astype(jnp.float32)     # (Tk, D)
    # Mask compare hoisted out of the head loop (computed once per tile, reused H times).
    masked = mask_ref[0] != 0              # (Tq, Tk) bool

    for h in range(H):                     # static unroll over heads
        sl = slice(h * d_k, (h + 1) * d_k)
        qh = qp[:, sl]                     # (Tq, d_k)
        kh = kp[:, sl]                     # (Tk, d_k)
        vh = vp[:, sl]                     # (Tk, d_k)

        # QK^T contracted on d_k without materializing kh.T (folded into the MXU feed).
        s = lax.dot_general(qh, kh, (((1,), (1,)), ((), ())),
                            preferred_element_type=jnp.float32)          # (Tq, Tk)
        # torch: x.masked_fill(mask == True, -1e-06)  (fill, not add)
        s = jnp.where(masked, jnp.float32(-1e-6), s)

        # Online (flash) softmax update — exact, per head.
        m_prev = m_sc[h]                                              # (Tq, 1)
        m_new = jnp.maximum(m_prev, jnp.max(s, axis=-1, keepdims=True))
        alpha = jnp.exp(m_prev - m_new)
        p = jnp.exp(s - m_new)                                        # (Tq, Tk)
        l_sc[h] = alpha * l_sc[h] + jnp.sum(p, axis=-1, keepdims=True)
        acc_sc[h] = alpha * acc_sc[h] + jnp.dot(p, vh,
                                                preferred_element_type=jnp.float32)
        m_sc[h] = m_new

    @pl.when(ki == nk - 1)
    def _finalize():
        # Normalized heads land in their final lane positions in a (Tq, D) slab so the
        # output projection is ONE full-width matmul (D-wide MXU contraction), not H
        # d_k-wide matmuls against Wo slices.
        for h in range(H):
            inv_l = pl.reciprocal(l_sc[h], approx=False)              # EUP, exact
            heads_sc[:, h * d_k:(h + 1) * d_k] = acc_sc[h] * inv_l    # static lane slice
        o_ref[0] = (jnp.dot(heads_sc[...], wo_ref[...],
                            preferred_element_type=jnp.float32)
                    + bo_ref[...]).astype(o_ref.dtype)


# ----------------------------------------- wrapper ----------------------------------------

def _pick_tile(n, target=128):
    if n >= target and n % target == 0:
        return target
    return n


def _clamp_vmem(nbytes):
    # Raise the scoped-VMEM limit when the tile plan needs it, but stay within what
    # every generation (incl. v7x's 64 MiB physical VMEM) can grant.
    return int(min(max(2 * nbytes + (1 << 20), 32 * 1024 * 1024), 64 * 1024 * 1024))


@jax.jit
def multi_head_attention(q, k, v, mask, wq, bq, wk, bk, wv, bv, wo, bo):
    """q/k/v: (B,S,D); mask: (B,S,S) nonzero==masked; wq/wk/wv: (H,D,d_k) (x@W form);
    bq/bk/bv: (H,d_k); wo: (D,D) (x@W form); bo: (1,D)."""
    B, S, D = q.shape
    H, _, d_k = wq.shape
    assert D == H * d_k

    # Fuse per-head projection weights head-major along lanes: (H,D,d_k) -> (D, H*d_k)=(D,D).
    wq_f = jnp.transpose(wq, (1, 0, 2)).reshape(D, H * d_k)
    wk_f = jnp.transpose(wk, (1, 0, 2)).reshape(D, H * d_k)
    wv_f = jnp.transpose(wv, (1, 0, 2)).reshape(D, H * d_k)
    bq_f = bq.reshape(1, H * d_k)
    bk_f = bk.reshape(1, H * d_k)
    bv_f = bv.reshape(1, H * d_k)
    mask_i8 = (mask != 0).astype(jnp.int8)   # 4x smaller DMA stream than int32

    Tm = _pick_tile(S)
    Tq = _pick_tile(S)
    Tk = _pick_tile(S)

    # ---- stage 1: fused projections, grid (B, S//Tm), parallel x parallel ----
    x_spec = pl.BlockSpec((1, Tm, D), lambda b, i: (b, i, 0))
    w_spec = pl.BlockSpec((D, D), lambda b, i: (0, 0))
    b_spec = pl.BlockSpec((1, D), lambda b, i: (0, 0))

    proj_block_bytes = 4 * (6 * Tm * D + 3 * (D * D + D))
    proj_kernel = functools.partial(qkv_proj_kernel,
                                    q_scale=float(1.0 / math.sqrt(d_k)))
    qp, kp, vp = pl.pallas_call(
        proj_kernel,
        out_shape=(jax.ShapeDtypeStruct((B, S, D), jnp.float32),) * 3,
        grid=(B, S // Tm),
        in_specs=[x_spec, x_spec, x_spec,
                  w_spec, b_spec, w_spec, b_spec, w_spec, b_spec],
        out_specs=(x_spec, x_spec, x_spec),
        compiler_params=pltpu.CompilerParams(
            dimension_semantics=("parallel", "parallel"),
            vmem_limit_bytes=_clamp_vmem(proj_block_bytes)),
        cost_estimate=pl.CostEstimate(
            flops=6 * B * S * D * D,
            transcendentals=0,
            bytes_accessed=4 * (6 * B * S * D + 3 * (D * D + D))),
    )(q, k, v, wq_f, bq_f, wk_f, bk_f, wv_f, bv_f)

    # ---- stage 2: flash attention + output projection, grid (B, S//Tq, S//Tk) ----
    q_spec = pl.BlockSpec((1, Tq, D), lambda b, qi, ki: (b, qi, 0))
    kv_spec = pl.BlockSpec((1, Tk, D), lambda b, qi, ki: (b, ki, 0))
    m_spec = pl.BlockSpec((1, Tq, Tk), lambda b, qi, ki: (b, qi, ki))
    wo_spec = pl.BlockSpec((D, D), lambda b, qi, ki: (0, 0))
    bo_spec = pl.BlockSpec((1, D), lambda b, qi, ki: (0, 0))
    o_spec = pl.BlockSpec((1, Tq, D), lambda b, qi, ki: (b, qi, 0))

    attn_block_bytes = (4 * (2 * Tq * D + 2 * Tk * D + D * D + D)
                        + Tq * Tk
                        + 4 * (H * Tq * (2 * 128 + max(d_k, 128)) + Tq * D))  # padded scratch
    out = pl.pallas_call(
        flash_mha_kernel,
        out_shape=jax.ShapeDtypeStruct((B, S, D), q.dtype),
        grid=(B, S // Tq, S // Tk),
        in_specs=[q_spec, kv_spec, kv_spec, m_spec, wo_spec, bo_spec],
        out_specs=o_spec,
        scratch_shapes=[pltpu.VMEM((H, Tq, 1), jnp.float32),     # running max
                        pltpu.VMEM((H, Tq, 1), jnp.float32),     # running denom
                        pltpu.VMEM((H, Tq, d_k), jnp.float32),   # running PV accumulator
                        pltpu.VMEM((Tq, D), jnp.float32)],       # normalized-heads slab
        compiler_params=pltpu.CompilerParams(
            dimension_semantics=("parallel", "parallel", "arbitrary"),
            vmem_limit_bytes=_clamp_vmem(attn_block_bytes)),
        cost_estimate=pl.CostEstimate(
            flops=4 * B * H * S * S * d_k + 2 * B * S * D * D,
            transcendentals=B * H * S * S,
            bytes_accessed=4 * (4 * B * S * D + D * D + D) + B * S * S),
    )(qp, kp, vp, mask_i8, wo, bo)
    return out


# --------------------------------------- reference ----------------------------------------

def reference_mha(q, k, v, mask_bool, wq, bq, wk, bk, wv, bv, wo, bo):
    """Pure-JAX reference mirroring the PyTorch module."""
    H, _, d_k = wq.shape
    heads = []
    for h in range(H):
        qh = q @ wq[h] + bq[h]
        kh = k @ wk[h] + bk[h]
        vh = v @ wv[h] + bv[h]
        s = jnp.einsum("bsd,btd->bst", qh, kh) / math.sqrt(d_k)
        s = jnp.where(mask_bool, -1e-6, s)
        p = jax.nn.softmax(s, axis=-1)
        heads.append(jnp.einsum("bst,btd->bsd", p, vh))
    concat = jnp.concatenate(heads, axis=-1)
    return concat @ wo + bo[0]


if __name__ == "__main__":
    # Small shapes consistent with the module (d_model divisible by num_heads).
    B, S, d_model, num_heads = 2, 8, 32, 4
    d_k = d_model // num_heads

    key = jax.random.PRNGKey(0)
    ks = jax.random.split(key, 12)

    q = jax.random.normal(ks[0], (B, S, d_model), jnp.float32)
    k = jax.random.normal(ks[1], (B, S, d_model), jnp.float32)
    v = jax.random.normal(ks[2], (B, S, d_model), jnp.float32)

    # Causal-style boolean mask (True == masked), as expected by masked_fill.
    mask_bool = jnp.triu(jnp.ones((S, S), dtype=bool), k=1)[None, :, :].repeat(B, axis=0)

    # Deterministic parameter init (nn.Linear(d_model, d_k) per head, stacked, x@W form).
    wq = 0.1 * jax.random.normal(ks[3], (num_heads, d_model, d_k), jnp.float32)
    bq = 0.1 * jax.random.normal(ks[4], (num_heads, d_k), jnp.float32)
    wk = 0.1 * jax.random.normal(ks[5], (num_heads, d_model, d_k), jnp.float32)
    bk = 0.1 * jax.random.normal(ks[6], (num_heads, d_k), jnp.float32)
    wv = 0.1 * jax.random.normal(ks[7], (num_heads, d_model, d_k), jnp.float32)
    bv = 0.1 * jax.random.normal(ks[8], (num_heads, d_k), jnp.float32)
    # Final nn.Linear(d_model, d_model): stored transposed -> x @ wo + bo.
    wo = 0.1 * jax.random.normal(ks[9], (d_model, d_model), jnp.float32)
    bo = 0.1 * jax.random.normal(ks[10], (1, d_model), jnp.float32)

    out = multi_head_attention(q, k, v, mask_bool,
                               wq, bq, wk, bk, wv, bv, wo, bo)
    out = jax.block_until_ready(out)

    ref = reference_mha(q, k, v, mask_bool, wq, bq, wk, bk, wv, bv, wo, bo)
    assert out.shape == (B, S, d_model)
    assert jnp.allclose(out, ref, atol=2e-4, rtol=2e-4), "mismatch vs pure-JAX reference"

    print("KERNEL_OK")
</pallas_src>

<mosaic_0001>
module attributes {stable_mosaic.version = 11 : i64} {
  func.func @qkv_proj_kernel(%arg0: i32, %arg1: i32, %arg2: memref<1x8x32xf32, #tpu.memory_space<vmem>>, %arg3: memref<1x8x32xf32, #tpu.memory_space<vmem>>, %arg4: memref<1x8x32xf32, #tpu.memory_space<vmem>>, %arg5: memref<32x32xf32, #tpu.memory_space<vmem>>, %arg6: memref<1x32xf32, #tpu.memory_space<vmem>>, %arg7: memref<32x32xf32, #tpu.memory_space<vmem>>, %arg8: memref<1x32xf32, #tpu.memory_space<vmem>>, %arg9: memref<32x32xf32, #tpu.memory_space<vmem>>, %arg10: memref<1x32xf32, #tpu.memory_space<vmem>>, %arg11: memref<1x8x32xf32, #tpu.memory_space<vmem>>, %arg12: memref<1x8x32xf32, #tpu.memory_space<vmem>>, %arg13: memref<1x8x32xf32, #tpu.memory_space<vmem>>) attributes {dimension_semantics = [#tpu.dimension_semantics<parallel>, #tpu.dimension_semantics<parallel>], iteration_bounds = array<i64: 2, 1>, scalar_prefetch = 0 : i64, scratch_operands = 0 : i64, tpu.core_type = #tpu.core_type<tc>, window_params = [{transform_indices = @transform_0, window_bounds = array<i64: 1, 8, 32>}, {transform_indices = @transform_1, window_bounds = array<i64: 1, 8, 32>}, {transform_indices = @transform_2, window_bounds = array<i64: 1, 8, 32>}, {pipeline_mode = #tpu.pipeline_mode<synchronous>, transform_indices = @transform_3, window_bounds = array<i64: 32, 32>}, {pipeline_mode = #tpu.pipeline_mode<synchronous>, transform_indices = @transform_4, window_bounds = array<i64: 1, 32>}, {pipeline_mode = #tpu.pipeline_mode<synchronous>, transform_indices = @transform_5, window_bounds = array<i64: 32, 32>}, {pipeline_mode = #tpu.pipeline_mode<synchronous>, transform_indices = @transform_6, window_bounds = array<i64: 1, 32>}, {pipeline_mode = #tpu.pipeline_mode<synchronous>, transform_indices = @transform_7, window_bounds = array<i64: 32, 32>}, {pipeline_mode = #tpu.pipeline_mode<synchronous>, transform_indices = @transform_8, window_bounds = array<i64: 1, 32>}, {transform_indices = @transform_9, window_bounds = array<i64: 1, 8, 32>}, {transform_indices = @transform_10, window_bounds = array<i64: 1, 8, 32>}, {transform_indices = @transform_11, window_bounds = array<i64: 1, 8, 32>}]} {
    %c0 = arith.constant 0 : index
    %c0_0 = arith.constant 0 : index
    %c0_1 = arith.constant 0 : index
    %0 = vector.load %arg2[%c0, %c0_0, %c0_1] : memref<1x8x32xf32, #tpu.memory_space<vmem>>, vector<1x8x32xf32>
    %1 = vector.shape_cast %0 : vector<1x8x32xf32> to vector<8x32xf32>
    %c0_2 = arith.constant 0 : index
    %c0_3 = arith.constant 0 : index
    %c0_4 = arith.constant 0 : index
    %2 = vector.load %arg3[%c0_2, %c0_3, %c0_4] : memref<1x8x32xf32, #tpu.memory_space<vmem>>, vector<1x8x32xf32>
    %3 = vector.shape_cast %2 : vector<1x8x32xf32> to vector<8x32xf32>
    %c0_5 = arith.constant 0 : index
    %c0_6 = arith.constant 0 : index
    %c0_7 = arith.constant 0 : index
    %4 = vector.load %arg4[%c0_5, %c0_6, %c0_7] : memref<1x8x32xf32, #tpu.memory_space<vmem>>, vector<1x8x32xf32>
    %5 = vector.shape_cast %4 : vector<1x8x32xf32> to vector<8x32xf32>
    %c0_8 = arith.constant 0 : index
    %c0_9 = arith.constant 0 : index
    %6 = vector.load %arg5[%c0_8, %c0_9] : memref<32x32xf32, #tpu.memory_space<vmem>>, vector<32x32xf32>
    %cst = arith.constant dense<0.000000e+00> : vector<8x32xf32>
    %7 = tpu.matmul %1, %6, %cst {dimension_numbers = #tpu.dot_dimension_numbers<[1], [0], [0], [1], [0, 0, 1, 1], [], []>} : vector<8x32xf32>, vector<32x32xf32>, vector<8x32xf32> -> vector<8x32xf32>
    %c0_10 = arith.constant 0 : index
    %c0_11 = arith.constant 0 : index
    %8 = vector.load %arg6[%c0_10, %c0_11] : memref<1x32xf32, #tpu.memory_space<vmem>>, vector<1x32xf32>
    %9 = vector.broadcast %8 : vector<1x32xf32> to vector<8x32xf32>
    %10 = arith.addf %7, %9 : vector<8x32xf32>
    %cst_12 = arith.constant 0.353553385 : f32
    %11 = vector.broadcast %cst_12 : f32 to vector<8x32xf32>
    %12 = arith.mulf %10, %11 : vector<8x32xf32>
    %c0_13 = arith.constant 0 : index
    %c0_14 = arith.constant 0 : index
    %c0_15 = arith.constant 0 : index
    %13 = vector.load %arg11[%c0_13, %c0_14, %c0_15] : memref<1x8x32xf32, #tpu.memory_space<vmem>>, vector<1x8x32xf32>
    %14 = vector.shape_cast %13 : vector<1x8x32xf32> to vector<8x32xf32>
    %15 = vector.shape_cast %12 : vector<8x32xf32> to vector<1x8x32xf32>
    tpu.vector_store %arg11[%c0_13, %c0_14, %c0_15], %15 {strides = array<i32>} : memref<1x8x32xf32, #tpu.memory_space<vmem>>, vector<1x8x32xf32>,
    %c0_16 = arith.constant 0 : index
    %c0_17 = arith.constant 0 : index
    %16 = vector.load %arg7[%c0_16, %c0_17] : memref<32x32xf32, #tpu.memory_space<vmem>>, vector<32x32xf32>
    %cst_18 = arith.constant dense<0.000000e+00> : vector<8x32xf32>
    %17 = tpu.matmul %3, %16, %cst_18 {dimension_numbers = #tpu.dot_dimension_numbers<[1], [0], [0], [1], [0, 0, 1, 1], [], []>} : vector<8x32xf32>, vector<32x32xf32>, vector<8x32xf32> -> vector<8x32xf32>
    %c0_19 = arith.constant 0 : index
    %c0_20 = arith.constant 0 : index
    %18 = vector.load %arg8[%c0_19, %c0_20] : memref<1x32xf32, #tpu.memory_space<vmem>>, vector<1x32xf32>
    %19 = vector.broadcast %18 : vector<1x32xf32> to vector<8x32xf32>
    %20 = arith.addf %17, %19 : vector<8x32xf32>
    %c0_21 = arith.constant 0 : index
    %c0_22 = arith.constant 0 : index
    %c0_23 = arith.constant 0 : index
    %21 = vector.load %arg12[%c0_21, %c0_22, %c0_23] : memref<1x8x32xf32, #tpu.memory_space<vmem>>, vector<1x8x32xf32>
    %22 = vector.shape_cast %21 : vector<1x8x32xf32> to vector<8x32xf32>
    %23 = vector.shape_cast %20 : vector<8x32xf32> to vector<1x8x32xf32>
    tpu.vector_store %arg12[%c0_21, %c0_22, %c0_23], %23 {strides = array<i32>} : memref<1x8x32xf32, #tpu.memory_space<vmem>>, vector<1x8x32xf32>,
    %c0_24 = arith.constant 0 : index
    %c0_25 = arith.constant 0 : index
    %24 = vector.load %arg9[%c0_24, %c0_25] : memref<32x32xf32, #tpu.memory_space<vmem>>, vector<32x32xf32>
    %cst_26 = arith.constant dense<0.000000e+00> : vector<8x32xf32>
    %25 = tpu.matmul %5, %24, %cst_26 {dimension_numbers = #tpu.dot_dimension_numbers<[1], [0], [0], [1], [0, 0, 1, 1], [], []>} : vector<8x32xf32>, vector<32x32xf32>, vector<8x32xf32> -> vector<8x32xf32>
    %c0_27 = arith.constant 0 : index
    %c0_28 = arith.constant 0 : index
    %26 = vector.load %arg10[%c0_27, %c0_28] : memref<1x32xf32, #tpu.memory_space<vmem>>, vector<1x32xf32>
    %27 = vector.broadcast %26 : vector<1x32xf32> to vector<8x32xf32>
    %28 = arith.addf %25, %27 : vector<8x32xf32>
    %c0_29 = arith.constant 0 : index
    %c0_30 = arith.constant 0 : index
    %c0_31 = arith.constant 0 : index
    %29 = vector.load %arg13[%c0_29, %c0_30, %c0_31] : memref<1x8x32xf32, #tpu.memory_space<vmem>>, vector<1x8x32xf32>
    %30 = vector.shape_cast %29 : vector<1x8x32xf32> to vector<8x32xf32>
    %31 = vector.shape_cast %28 : vector<8x32xf32> to vector<1x8x32xf32>
    tpu.vector_store %arg13[%c0_29, %c0_30, %c0_31], %31 {strides = array<i32>} : memref<1x8x32xf32, #tpu.memory_space<vmem>>, vector<1x8x32xf32>,
    return
  }
  func.func @transform_0(%arg0: i32, %arg1: i32) -> (i32, i32, i32) {
    %c0_i32 = arith.constant 0 : i32
    %c0_i32_0 = arith.constant 0 : i32
    return %arg0, %arg1, %c0_i32 : i32, i32, i32
  }
  func.func @transform_1(%arg0: i32, %arg1: i32) -> (i32, i32, i32) {
    %c0_i32 = arith.constant 0 : i32
    %c0_i32_0 = arith.constant 0 : i32
    return %arg0, %arg1, %c0_i32 : i32, i32, i32
  }
  func.func @transform_2(%arg0: i32, %arg1: i32) -> (i32, i32, i32) {
    %c0_i32 = arith.constant 0 : i32
    %c0_i32_0 = arith.constant 0 : i32
    return %arg0, %arg1, %c0_i32 : i32, i32, i32
  }
  func.func @transform_3(%arg0: i32, %arg1: i32) -> (i32, i32) {
    %c0_i32 = arith.constant 0 : i32
    %c0_i32_0 = arith.constant 0 : i32
    %c0_i32_1 = arith.constant 0 : i32
    return %c0_i32, %c0_i32_0 : i32, i32
  }
  func.func @transform_4(%arg0: i32, %arg1: i32) -> (i32, i32) {
    %c0_i32 = arith.constant 0 : i32
    %c0_i32_0 = arith.constant 0 : i32
    %c0_i32_1 = arith.constant 0 : i32
    return %c0_i32, %c0_i32_0 : i32, i32
  }
  func.func @transform_5(%arg0: i32, %arg1: i32) -> (i32, i32) {
    %c0_i32 = arith.constant 0 : i32
    %c0_i32_0 = arith.constant 0 : i32
    %c0_i32_1 = arith.constant 0 : i32
    return %c0_i32, %c0_i32_0 : i32, i32
  }
  func.func @transform_6(%arg0: i32, %arg1: i32) -> (i32, i32) {
    %c0_i32 = arith.constant 0 : i32
    %c0_i32_0 = arith.constant 0 : i32
    %c0_i32_1 = arith.constant 0 : i32
    return %c0_i32, %c0_i32_0 : i32, i32
  }
  func.func @transform_7(%arg0: i32, %arg1: i32) -> (i32, i32) {
    %c0_i32 = arith.constant 0 : i32
    %c0_i32_0 = arith.constant 0 : i32
    %c0_i32_1 = arith.constant 0 : i32
    return %c0_i32, %c0_i32_0 : i32, i32
  }
  func.func @transform_8(%arg0: i32, %arg1: i32) -> (i32, i32) {
    %c0_i32 = arith.constant 0 : i32
    %c0_i32_0 = arith.constant 0 : i32
    %c0_i32_1 = arith.constant 0 : i32
    return %c0_i32, %c0_i32_0 : i32, i32
  }
  func.func @transform_9(%arg0: i32, %arg1: i32) -> (i32, i32, i32) {
    %c0_i32 = arith.constant 0 : i32
    %c0_i32_0 = arith.constant 0 : i32
    return %arg0, %arg1, %c0_i32 : i32, i32, i32
  }
  func.func @transform_10(%arg0: i32, %arg1: i32) -> (i32, i32, i32) {
    %c0_i32 = arith.constant 0 : i32
    %c0_i32_0 = arith.constant 0 : i32
    return %arg0, %arg1, %c0_i32 : i32, i32, i32
  }
  func.func @transform_11(%arg0: i32, %arg1: i32) -> (i32, i32, i32) {
    %c0_i32 = arith.constant 0 : i32
    %c0_i32_0 = arith.constant 0 : i32
    return %arg0, %arg1, %c0_i32 : i32, i32, i32
  }
}

module attributes {stable_mosaic.version = 11 : i64} {
  func.func @flash_mha_kernel(%arg0: i32, %arg1: i32, %arg2: i32, %arg3: memref<1x8x32xf32, #tpu.memory_space<vmem>>, %arg4: memref<1x8x32xf32, #tpu.memory_space<vmem>>, %arg5: memref<1x8x32xf32, #tpu.memory_space<vmem>>, %arg6: memref<1x8x8xi8, #tpu.memory_space<vmem>>, %arg7: memref<32x32xf32, #tpu.memory_space<vmem>>, %arg8: memref<1x32xf32, #tpu.memory_space<vmem>>, %arg9: memref<1x8x32xf32, #tpu.memory_space<vmem>>, %arg10: memref<4x8x1xf32, #tpu.memory_space<vmem>>, %arg11: memref<4x8x1xf32, #tpu.memory_space<vmem>>, %arg12: memref<4x8x8xf32, #tpu.memory_space<vmem>>, %arg13: memref<8x32xf32, #tpu.memory_space<vmem>>) attributes {dimension_semantics = [#tpu.dimension_semantics<parallel>, #tpu.dimension_semantics<parallel>, #tpu.dimension_semantics<arbitrary>], iteration_bounds = array<i64: 2, 1, 1>, scalar_prefetch = 0 : i64, scratch_operands = 4 : i64, tpu.core_type = #tpu.core_type<tc>, window_params = [{transform_indices = @transform_0, window_bounds = array<i64: 1, 8, 32>}, {transform_indices = @transform_1, window_bounds = array<i64: 1, 8, 32>}, {transform_indices = @transform_2, window_bounds = array<i64: 1, 8, 32>}, {transform_indices = @transform_3, window_bounds = array<i64: 1, 8, 8>}, {pipeline_mode = #tpu.pipeline_mode<synchronous>, transform_indices = @transform_4, window_bounds = array<i64: 32, 32>}, {pipeline_mode = #tpu.pipeline_mode<synchronous>, transform_indices = @transform_5, window_bounds = array<i64: 1, 32>}, {transform_indices = @transform_6, window_bounds = array<i64: 1, 8, 32>}]} {
    %c0_i32 = arith.constant 0 : i32
    %0 = arith.cmpi eq, %arg2, %c0_i32 : i32
    %1 = arith.extui %0 : i1 to i32
    %c0_i32_0 = arith.constant 0 : i32
    %2 = arith.cmpi ne, %1, %c0_i32_0 : i32
    scf.if %2 {
      %cst_102 = arith.constant 0xFF800000 : f32
      %164 = vector.broadcast %cst_102 : f32 to vector<4x8x1xf32>
      %c0_103 = arith.constant 0 : index
      %c0_104 = arith.constant 0 : index
      %c0_105 = arith.constant 0 : index
      %165 = vector.load %arg10[%c0_103, %c0_104, %c0_105] : memref<4x8x1xf32, #tpu.memory_space<vmem>>, vector<4x8x1xf32>
      tpu.vector_store %arg10[%c0_103, %c0_104, %c0_105], %164 {strides = array<i32>} : memref<4x8x1xf32, #tpu.memory_space<vmem>>, vector<4x8x1xf32>,
      %cst_106 = arith.constant 0.000000e+00 : f32
      %166 = vector.broadcast %cst_106 : f32 to vector<4x8x1xf32>
      %c0_107 = arith.constant 0 : index
      %c0_108 = arith.constant 0 : index
      %c0_109 = arith.constant 0 : index
      %167 = vector.load %arg11[%c0_107, %c0_108, %c0_109] : memref<4x8x1xf32, #tpu.memory_space<vmem>>, vector<4x8x1xf32>
      tpu.vector_store %arg11[%c0_107, %c0_108, %c0_109], %166 {strides = array<i32>} : memref<4x8x1xf32, #tpu.memory_space<vmem>>, vector<4x8x1xf32>,
      %cst_110 = arith.constant 0.000000e+00 : f32
      %168 = vector.broadcast %cst_110 : f32 to vector<4x8x8xf32>
      %c0_111 = arith.constant 0 : index
      %c0_112 = arith.constant 0 : index
      %c0_113 = arith.constant 0 : index
      %169 = vector.load %arg12[%c0_111, %c0_112, %c0_113] : memref<4x8x8xf32, #tpu.memory_space<vmem>>, vector<4x8x8xf32>
      tpu.vector_store %arg12[%c0_111, %c0_112, %c0_113], %168 {strides = array<i32>} : memref<4x8x8xf32, #tpu.memory_space<vmem>>, vector<4x8x8xf32>,
    } else {
    }
    %c0 = arith.constant 0 : index
    %c0_1 = arith.constant 0 : index
    %c0_2 = arith.constant 0 : index
    %3 = vector.load %arg3[%c0, %c0_1, %c0_2] : memref<1x8x32xf32, #tpu.memory_space<vmem>>, vector<1x8x32xf32>
    %4 = vector.shape_cast %3 : vector<1x8x32xf32> to vector<8x32xf32>
    %c0_3 = arith.constant 0 : index
    %c0_4 = arith.constant 0 : index
    %c0_5 = arith.constant 0 : index
    %5 = vector.load %arg4[%c0_3, %c0_4, %c0_5] : memref<1x8x32xf32, #tpu.memory_space<vmem>>, vector<1x8x32xf32>
    %6 = vector.shape_cast %5 : vector<1x8x32xf32> to vector<8x32xf32>
    %c0_6 = arith.constant 0 : index
    %c0_7 = arith.constant 0 : index
    %c0_8 = arith.constant 0 : index
    %7 = vector.load %arg5[%c0_6, %c0_7, %c0_8] : memref<1x8x32xf32, #tpu.memory_space<vmem>>, vector<1x8x32xf32>
    %8 = vector.shape_cast %7 : vector<1x8x32xf32> to vector<8x32xf32>
    %c0_9 = arith.constant 0 : index
    %c0_10 = arith.constant 0 : index
    %c0_11 = arith.constant 0 : index
    %9 = vector.load %arg6[%c0_9, %c0_10, %c0_11] : memref<1x8x8xi8, #tpu.memory_space<vmem>>, vector<1x8x8xi8>
    %10 = vector.shape_cast %9 : vector<1x8x8xi8> to vector<8x8xi8>
    %c0_i8 = arith.constant 0 : i8
    %11 = vector.broadcast %c0_i8 : i8 to vector<8x8xi8>
    %12 = arith.cmpi ne, %10, %11 : vector<8x8xi8>
    %13 = vector.extract_strided_slice %4 {offsets = [0, 0], sizes = [8, 8], strides = [1, 1]} : vector<8x32xf32> to vector<8x8xf32>
    %14 = vector.extract_strided_slice %6 {offsets = [0, 0], sizes = [8, 8], strides = [1, 1]} : vector<8x32xf32> to vector<8x8xf32>
    %15 = vector.extract_strided_slice %8 {offsets = [0, 0], sizes = [8, 8], strides = [1, 1]} : vector<8x32xf32> to vector<8x8xf32>
    %cst = arith.constant dense<0.000000e+00> : vector<8x8xf32>
    %16 = tpu.matmul %13, %14, %cst {dimension_numbers = #tpu.dot_dimension_numbers<[1], [1], [0], [0], [0, 0, 1, 0], [], []>} : vector<8x8xf32>, vector<8x8xf32>, vector<8x8xf32> -> vector<8x8xf32>
    %cst_12 = arith.constant -9.99999997E-7 : f32
    %17 = vector.broadcast %cst_12 : f32 to vector<8x8xf32>
    %18 = arith.select %12, %17, %16 : vector<8x8xi1>, vector<8x8xf32>
    %c0_13 = arith.constant 0 : index
    %c0_14 = arith.constant 0 : index
    %c0_15 = arith.constant 0 : index
    %19 = vector.load %arg10[%c0_13, %c0_14, %c0_15] : memref<4x8x1xf32, #tpu.memory_space<vmem>>, vector<1x8x1xf32>
    %20 = vector.shape_cast %19 : vector<1x8x1xf32> to vector<8x1xf32>
    %cst_16 = arith.constant dense<0xFF800000> : vector<8xf32>
    %21 = vector.multi_reduction <maximumf>, %18, %cst_16 [1] : vector<8x8xf32> to vector<8xf32>
    %22 = vector.shape_cast %21 : vector<8xf32> to vector<8x1xf32>
    %23 = arith.maximumf %20, %22 : vector<8x1xf32>
    %24 = arith.subf %20, %23 : vector<8x1xf32>
    %25 = math.exp %24 : vector<8x1xf32>
    %26 = vector.broadcast %23 : vector<8x1xf32> to vector<8x8xf32>
    %27 = arith.subf %18, %26 : vector<8x8xf32>
    %28 = math.exp %27 : vector<8x8xf32>
    %c0_17 = arith.constant 0 : index
    %c0_18 = arith.constant 0 : index
    %c0_19 = arith.constant 0 : index
    %29 = vector.load %arg11[%c0_17, %c0_18, %c0_19] : memref<4x8x1xf32, #tpu.memory_space<vmem>>, vector<1x8x1xf32>
    %30 = vector.shape_cast %29 : vector<1x8x1xf32> to vector<8x1xf32>
    %31 = arith.mulf %25, %30 : vector<8x1xf32>
    %cst_20 = arith.constant dense<0.000000e+00> : vector<8xf32>
    %32 = vector.multi_reduction <add>, %28, %cst_20 [1] : vector<8x8xf32> to vector<8xf32>
    %33 = vector.shape_cast %32 : vector<8xf32> to vector<8x1xf32>
    %34 = arith.addf %31, %33 : vector<8x1xf32>
    %c0_21 = arith.constant 0 : index
    %c0_22 = arith.constant 0 : index
    %c0_23 = arith.constant 0 : index
    %35 = vector.load %arg11[%c0_21, %c0_22, %c0_23] : memref<4x8x1xf32, #tpu.memory_space<vmem>>, vector<1x8x1xf32>
    %36 = vector.shape_cast %35 : vector<1x8x1xf32> to vector<8x1xf32>
    %37 = vector.shape_cast %34 : vector<8x1xf32> to vector<1x8x1xf32>
    tpu.vector_store %arg11[%c0_21, %c0_22, %c0_23], %37 {strides = array<i32>} : memref<4x8x1xf32, #tpu.memory_space<vmem>>, vector<1x8x1xf32>,
    %c0_24 = arith.constant 0 : index
    %c0_25 = arith.constant 0 : index
    %c0_26 = arith.constant 0 : index
    %38 = vector.load %arg12[%c0_24, %c0_25, %c0_26] : memref<4x8x8xf32, #tpu.memory_space<vmem>>, vector<1x8x8xf32>
    %39 = vector.shape_cast %38 : vector<1x8x8xf32> to vector<8x8xf32>
    %40 = vector.broadcast %25 : vector<8x1xf32> to vector<8x8xf32>
    %41 = arith.mulf %40, %39 : vector<8x8xf32>
    %cst_27 = arith.constant dense<0.000000e+00> : vector<8x8xf32>
    %42 = tpu.matmul %28, %15, %cst_27 {dimension_numbers = #tpu.dot_dimension_numbers<[1], [0], [0], [1], [0, 0, 1, 1], [], []>} : vector<8x8xf32>, vector<8x8xf32>, vector<8x8xf32> -> vector<8x8xf32>
    %43 = arith.addf %41, %42 : vector<8x8xf32>
    %c0_28 = arith.constant 0 : index
    %c0_29 = arith.constant 0 : index
    %c0_30 = arith.constant 0 : index
    %44 = vector.load %arg12[%c0_28, %c0_29, %c0_30] : memref<4x8x8xf32, #tpu.memory_space<vmem>>, vector<1x8x8xf32>
    %45 = vector.shape_cast %44 : vector<1x8x8xf32> to vector<8x8xf32>
    %46 = vector.shape_cast %43 : vector<8x8xf32> to vector<1x8x8xf32>
    tpu.vector_store %arg12[%c0_28, %c0_29, %c0_30], %46 {strides = array<i32>} : memref<4x8x8xf32, #tpu.memory_space<vmem>>, vector<1x8x8xf32>,
    %c0_31 = arith.constant 0 : index
    %c0_32 = arith.constant 0 : index
    %c0_33 = arith.constant 0 : index
    %47 = vector.load %arg10[%c0_31, %c0_32, %c0_33] : memref<4x8x1xf32, #tpu.memory_space<vmem>>, vector<1x8x1xf32>
    %48 = vector.shape_cast %47 : vector<1x8x1xf32> to vector<8x1xf32>
    %49 = vector.shape_cast %23 : vector<8x1xf32> to vector<1x8x1xf32>
    tpu.vector_store %arg10[%c0_31, %c0_32, %c0_33], %49 {strides = array<i32>} : memref<4x8x1xf32, #tpu.memory_space<vmem>>, vector<1x8x1xf32>,
    %50 = vector.extract_strided_slice %4 {offsets = [0, 8], sizes = [8, 8], strides = [1, 1]} : vector<8x32xf32> to vector<8x8xf32>
    %51 = vector.extract_strided_slice %6 {offsets = [0, 8], sizes = [8, 8], strides = [1, 1]} : vector<8x32xf32> to vector<8x8xf32>
    %52 = vector.extract_strided_slice %8 {offsets = [0, 8], sizes = [8, 8], strides = [1, 1]} : vector<8x32xf32> to vector<8x8xf32>
    %cst_34 = arith.constant dense<0.000000e+00> : vector<8x8xf32>
    %53 = tpu.matmul %50, %51, %cst_34 {dimension_numbers = #tpu.dot_dimension_numbers<[1], [1], [0], [0], [0, 0, 1, 0], [], []>} : vector<8x8xf32>, vector<8x8xf32>, vector<8x8xf32> -> vector<8x8xf32>
    %cst_35 = arith.constant -9.99999997E-7 : f32
    %54 = vector.broadcast %cst_35 : f32 to vector<8x8xf32>
    %55 = arith.select %12, %54, %53 : vector<8x8xi1>, vector<8x8xf32>
    %c1 = arith.constant 1 : index
    %c0_36 = arith.constant 0 : index
    %c0_37 = arith.constant 0 : index
    %56 = vector.load %arg10[%c1, %c0_36, %c0_37] : memref<4x8x1xf32, #tpu.memory_space<vmem>>, vector<1x8x1xf32>
    %57 = vector.shape_cast %56 : vector<1x8x1xf32> to vector<8x1xf32>
    %cst_38 = arith.constant dense<0xFF800000> : vector<8xf32>
    %58 = vector.multi_reduction <maximumf>, %55, %cst_38 [1] : vector<8x8xf32> to vector<8xf32>
    %59 = vector.shape_cast %58 : vector<8xf32> to vector<8x1xf32>
    %60 = arith.maximumf %57, %59 : vector<8x1xf32>
    %61 = arith.subf %57, %60 : vector<8x1xf32>
    %62 = math.exp %61 : vector<8x1xf32>
    %63 = vector.broadcast %60 : vector<8x1xf32> to vector<8x8xf32>
    %64 = arith.subf %55, %63 : vector<8x8xf32>
    %65 = math.exp %64 : vector<8x8xf32>
    %c1_39 = arith.constant 1 : index
    %c0_40 = arith.constant 0 : index
    %c0_41 = arith.constant 0 : index
    %66 = vector.load %arg11[%c1_39, %c0_40, %c0_41] : memref<4x8x1xf32, #tpu.memory_space<vmem>>, vector<1x8x1xf32>
    %67 = vector.shape_cast %66 : vector<1x8x1xf32> to vector<8x1xf32>
    %68 = arith.mulf %62, %67 : vector<8x1xf32>
    %cst_42 = arith.constant dense<0.000000e+00> : vector<8xf32>
    %69 = vector.multi_reduction <add>, %65, %cst_42 [1] : vector<8x8xf32> to vector<8xf32>
    %70 = vector.shape_cast %69 : vector<8xf32> to vector<8x1xf32>
    %71 = arith.addf %68, %70 : vector<8x1xf32>
    %c1_43 = arith.constant 1 : index
    %c0_44 = arith.constant 0 : index
    %c0_45 = arith.constant 0 : index
    %72 = vector.load %arg11[%c1_43, %c0_44, %c0_45] : memref<4x8x1xf32, #tpu.memory_space<vmem>>, vector<1x8x1xf32>
    %73 = vector.shape_cast %72 : vector<1x8x1xf32> to vector<8x1xf32>
    %74 = vector.shape_cast %71 : vector<8x1xf32> to vector<1x8x1xf32>
    tpu.vector_store %arg11[%c1_43, %c0_44, %c0_45], %74 {strides = array<i32>} : memref<4x8x1xf32, #tpu.memory_space<vmem>>, vector<1x8x1xf32>,
    %c1_46 = arith.constant 1 : index
    %c0_47 = arith.constant 0 : index
    %c0_48 = arith.constant 0 : index
    %75 = vector.load %arg12[%c1_46, %c0_47, %c0_48] : memref<4x8x8xf32, #tpu.memory_space<vmem>>, vector<1x8x8xf32>
    %76 = vector.shape_cast %75 : vector<1x8x8xf32> to vector<8x8xf32>
    %77 = vector.broadcast %62 : vector<8x1xf32> to vector<8x8xf32>
    %78 = arith.mulf %77, %76 : vector<8x8xf32>
    %cst_49 = arith.constant dense<0.000000e+00> : vector<8x8xf32>
    %79 = tpu.matmul %65, %52, %cst_49 {dimension_numbers = #tpu.dot_dimension_numbers<[1], [0], [0], [1], [0, 0, 1, 1], [], []>} : vector<8x8xf32>, vector<8x8xf32>, vector<8x8xf32> -> vector<8x8xf32>
    %80 = arith.addf %78, %79 : vector<8x8xf32>
    %c1_50 = arith.constant 1 : index
    %c0_51 = arith.constant 0 : index
    %c0_52 = arith.constant 0 : index
    %81 = vector.load %arg12[%c1_50, %c0_51, %c0_52] : memref<4x8x8xf32, #tpu.memory_space<vmem>>, vector<1x8x8xf32>
    %82 = vector.shape_cast %81 : vector<1x8x8xf32> to vector<8x8xf32>
    %83 = vector.shape_cast %80 : vector<8x8xf32> to vector<1x8x8xf32>
    tpu.vector_store %arg12[%c1_50, %c0_51, %c0_52], %83 {strides = array<i32>} : memref<4x8x8xf32, #tpu.memory_space<vmem>>, vector<1x8x8xf32>,
    %c1_53 = arith.constant 1 : index
    %c0_54 = arith.constant 0 : index
    %c0_55 = arith.constant 0 : index
    %84 = vector.load %arg10[%c1_53, %c0_54, %c0_55] : memref<4x8x1xf32, #tpu.memory_space<vmem>>, vector<1x8x1xf32>
    %85 = vector.shape_cast %84 : vector<1x8x1xf32> to vector<8x1xf32>
    %86 = vector.shape_cast %60 : vector<8x1xf32> to vector<1x8x1xf32>
    tpu.vector_store %arg10[%c1_53, %c0_54, %c0_55], %86 {strides = array<i32>} : memref<4x8x1xf32, #tpu.memory_space<vmem>>, vector<1x8x1xf32>,
    %87 = vector.extract_strided_slice %4 {offsets = [0, 16], sizes = [8, 8], strides = [1, 1]} : vector<8x32xf32> to vector<8x8xf32>
    %88 = vector.extract_strided_slice %6 {offsets = [0, 16], sizes = [8, 8], strides = [1, 1]} : vector<8x32xf32> to vector<8x8xf32>
    %89 = vector.extract_strided_slice %8 {offsets = [0, 16], sizes = [8, 8], strides = [1, 1]} : vector<8x32xf32> to vector<8x8xf32>
    %cst_56 = arith.constant dense<0.000000e+00> : vector<8x8xf32>
    %90 = tpu.matmul %87, %88, %cst_56 {dimension_numbers = #tpu.dot_dimension_numbers<[1], [1], [0], [0], [0, 0, 1, 0], [], []>} : vector<8x8xf32>, vector<8x8xf32>, vector<8x8xf32> -> vector<8x8xf32>
    %cst_57 = arith.constant -9.99999997E-7 : f32
    %91 = vector.broadcast %cst_57 : f32 to vector<8x8xf32>
    %92 = arith.select %12, %91, %90 : vector<8x8xi1>, vector<8x8xf32>
    %c2 = arith.constant 2 : index
    %c0_58 = arith.constant 0 : index
    %c0_59 = arith.constant 0 : index
    %93 = vector.load %arg10[%c2, %c0_58, %c0_59] : memref<4x8x1xf32, #tpu.memory_space<vmem>>, vector<1x8x1xf32>
    %94 = vector.shape_cast %93 : vector<1x8x1xf32> to vector<8x1xf32>
    %cst_60 = arith.constant dense<0xFF800000> : vector<8xf32>
    %95 = vector.multi_reduction <maximumf>, %92, %cst_60 [1] : vector<8x8xf32> to vector<8xf32>
    %96 = vector.shape_cast %95 : vector<8xf32> to vector<8x1xf32>
    %97 = arith.maximumf %94, %96 : vector<8x1xf32>
    %98 = arith.subf %94, %97 : vector<8x1xf32>
    %99 = math.exp %98 : vector<8x1xf32>
    %100 = vector.broadcast %97 : vector<8x1xf32> to vector<8x8xf32>
    %101 = arith.subf %92, %100 : vector<8x8xf32>
    %102 = math.exp %101 : vector<8x8xf32>
    %c2_61 = arith.constant 2 : index
    %c0_62 = arith.constant 0 : index
    %c0_63 = arith.constant 0 : index
    %103 = vector.load %arg11[%c2_61, %c0_62, %c0_63] : memref<4x8x1xf32, #tpu.memory_space<vmem>>, vector<1x8x1xf32>
    %104 = vector.shape_cast %103 : vector<1x8x1xf32> to vector<8x1xf32>
    %105 = arith.mulf %99, %104 : vector<8x1xf32>
    %cst_64 = arith.constant dense<0.000000e+00> : vector<8xf32>
    %106 = vector.multi_reduction <add>, %102, %cst_64 [1] : vector<8x8xf32> to vector<8xf32>
    %107 = vector.shape_cast %106 : vector<8xf32> to vector<8x1xf32>
    %108 = arith.addf %105, %107 : vector<8x1xf32>
    %c2_65 = arith.constant 2 : index
    %c0_66 = arith.constant 0 : index
    %c0_67 = arith.constant 0 : index
    %109 = vector.load %arg11[%c2_65, %c0_66, %c0_67] : memref<4x8x1xf32, #tpu.memory_space<vmem>>, vector<1x8x1xf32>
    %110 = vector.shape_cast %109 : vector<1x8x1xf32> to vector<8x1xf32>
    %111 = vector.shape_cast %108 : vector<8x1xf32> to vector<1x8x1xf32>
    tpu.vector_store %arg11[%c2_65, %c0_66, %c0_67], %111 {strides = array<i32>} : memref<4x8x1xf32, #tpu.memory_space<vmem>>, vector<1x8x1xf32>,
    %c2_68 = arith.constant 2 : index
    %c0_69 = arith.constant 0 : index
    %c0_70 = arith.constant 0 : index
    %112 = vector.load %arg12[%c2_68, %c0_69, %c0_70] : memref<4x8x8xf32, #tpu.memory_space<vmem>>, vector<1x8x8xf32>
    %113 = vector.shape_cast %112 : vector<1x8x8xf32> to vector<8x8xf32>
    %114 = vector.broadcast %99 : vector<8x1xf32> to vector<8x8xf32>
    %115 = arith.mulf %114, %113 : vector<8x8xf32>
    %cst_71 = arith.constant dense<0.000000e+00> : vector<8x8xf32>
    %116 = tpu.matmul %102, %89, %cst_71 {dimension_numbers = #tpu.dot_dimension_numbers<[1], [0], [0], [1], [0, 0, 1, 1], [], []>} : vector<8x8xf32>, vector<8x8xf32>, vector<8x8xf32> -> vector<8x8xf32>
    %117 = arith.addf %115, %116 : vector<8x8xf32>
    %c2_72 = arith.constant 2 : index
    %c0_73 = arith.constant 0 : index
    %c0_74 = arith.constant 0 : index
    %118 = vector.load %arg12[%c2_72, %c0_73, %c0_74] : memref<4x8x8xf32, #tpu.memory_space<vmem>>, vector<1x8x8xf32>
    %119 = vector.shape_cast %118 : vector<1x8x8xf32> to vector<8x8xf32>
    %120 = vector.shape_cast %117 : vector<8x8xf32> to vector<1x8x8xf32>
    tpu.vector_store %arg12[%c2_72, %c0_73, %c0_74], %120 {strides = array<i32>} : memref<4x8x8xf32, #tpu.memory_space<vmem>>, vector<1x8x8xf32>,
    %c2_75 = arith.constant 2 : index
    %c0_76 = arith.constant 0 : index
    %c0_77 = arith.constant 0 : index
    %121 = vector.load %arg10[%c2_75, %c0_76, %c0_77] : memref<4x8x1xf32, #tpu.memory_space<vmem>>, vector<1x8x1xf32>
    %122 = vector.shape_cast %121 : vector<1x8x1xf32> to vector<8x1xf32>
    %123 = vector.shape_cast %97 : vector<8x1xf32> to vector<1x8x1xf32>
    tpu.vector_store %arg10[%c2_75, %c0_76, %c0_77], %123 {strides = array<i32>} : memref<4x8x1xf32, #tpu.memory_space<vmem>>, vector<1x8x1xf32>,
    %124 = vector.extract_strided_slice %4 {offsets = [0, 24], sizes = [8, 8], strides = [1, 1]} : vector<8x32xf32> to vector<8x8xf32>
    %125 = vector.extract_strided_slice %6 {offsets = [0, 24], sizes = [8, 8], strides = [1, 1]} : vector<8x32xf32> to vector<8x8xf32>
    %126 = vector.extract_strided_slice %8 {offsets = [0, 24], sizes = [8, 8], strides = [1, 1]} : vector<8x32xf32> to vector<8x8xf32>
    %cst_78 = arith.constant dense<0.000000e+00> : vector<8x8xf32>
    %127 = tpu.matmul %124, %125, %cst_78 {dimension_numbers = #tpu.dot_dimension_numbers<[1], [1], [0], [0], [0, 0, 1, 0], [], []>} : vector<8x8xf32>, vector<8x8xf32>, vector<8x8xf32> -> vector<8x8xf32>
    %cst_79 = arith.constant -9.99999997E-7 : f32
    %128 = vector.broadcast %cst_79 : f32 to vector<8x8xf32>
    %129 = arith.select %12, %128, %127 : vector<8x8xi1>, vector<8x8xf32>
    %c3 = arith.constant 3 : index
    %c0_80 = arith.constant 0 : index
    %c0_81 = arith.constant 0 : index
    %130 = vector.load %arg10[%c3, %c0_80, %c0_81] : memref<4x8x1xf32, #tpu.memory_space<vmem>>, vector<1x8x1xf32>
    %131 = vector.shape_cast %130 : vector<1x8x1xf32> to vector<8x1xf32>
    %cst_82 = arith.constant dense<0xFF800000> : vector<8xf32>
    %132 = vector.multi_reduction <maximumf>, %129, %cst_82 [1] : vector<8x8xf32> to vector<8xf32>
    %133 = vector.shape_cast %132 : vector<8xf32> to vector<8x1xf32>
    %134 = arith.maximumf %131, %133 : vector<8x1xf32>
    %135 = arith.subf %131, %134 : vector<8x1xf32>
    %136 = math.exp %135 : vector<8x1xf32>
    %137 = vector.broadcast %134 : vector<8x1xf32> to vector<8x8xf32>
    %138 = arith.subf %129, %137 : vector<8x8xf32>
    %139 = math.exp %138 : vector<8x8xf32>
    %c3_83 = arith.constant 3 : index
    %c0_84 = arith.constant 0 : index
    %c0_85 = arith.constant 0 : index
    %140 = vector.load %arg11[%c3_83, %c0_84, %c0_85] : memref<4x8x1xf32, #tpu.memory_space<vmem>>, vector<1x8x1xf32>
    %141 = vector.shape_cast %140 : vector<1x8x1xf32> to vector<8x1xf32>
    %142 = arith.mulf %136, %141 : vector<8x1xf32>
    %cst_86 = arith.constant dense<0.000000e+00> : vector<8xf32>
    %143 = vector.multi_reduction <add>, %139, %cst_86 [1] : vector<8x8xf32> to vector<8xf32>
    %144 = vector.shape_cast %143 : vector<8xf32> to vector<8x1xf32>
    %145 = arith.addf %142, %144 : vector<8x1xf32>
    %c3_87 = arith.constant 3 : index
    %c0_88 = arith.constant 0 : index
    %c0_89 = arith.constant 0 : index
    %146 = vector.load %arg11[%c3_87, %c0_88, %c0_89] : memref<4x8x1xf32, #tpu.memory_space<vmem>>, vector<1x8x1xf32>
    %147 = vector.shape_cast %146 : vector<1x8x1xf32> to vector<8x1xf32>
    %148 = vector.shape_cast %145 : vector<8x1xf32> to vector<1x8x1xf32>
    tpu.vector_store %arg11[%c3_87, %c0_88, %c0_89], %148 {strides = array<i32>} : memref<4x8x1xf32, #tpu.memory_space<vmem>>, vector<1x8x1xf32>,
    %c3_90 = arith.constant 3 : index
    %c0_91 = arith.constant 0 : index
    %c0_92 = arith.constant 0 : index
    %149 = vector.load %arg12[%c3_90, %c0_91, %c0_92] : memref<4x8x8xf32, #tpu.memory_space<vmem>>, vector<1x8x8xf32>
    %150 = vector.shape_cast %149 : vector<1x8x8xf32> to vector<8x8xf32>
    %151 = vector.broadcast %136 : vector<8x1xf32> to vector<8x8xf32>
    %152 = arith.mulf %151, %150 : vector<8x8xf32>
    %cst_93 = arith.constant dense<0.000000e+00> : vector<8x8xf32>
    %153 = tpu.matmul %139, %126, %cst_93 {dimension_numbers = #tpu.dot_dimension_numbers<[1], [0], [0], [1], [0, 0, 1, 1], [], []>} : vector<8x8xf32>, vector<8x8xf32>, vector<8x8xf32> -> vector<8x8xf32>
    %154 = arith.addf %152, %153 : vector<8x8xf32>
    %c3_94 = arith.constant 3 : index
    %c0_95 = arith.constant 0 : index
    %c0_96 = arith.constant 0 : index
    %155 = vector.load %arg12[%c3_94, %c0_95, %c0_96] : memref<4x8x8xf32, #tpu.memory_space<vmem>>, vector<1x8x8xf32>
    %156 = vector.shape_cast %155 : vector<1x8x8xf32> to vector<8x8xf32>
    %157 = vector.shape_cast %154 : vector<8x8xf32> to vector<1x8x8xf32>
    tpu.vector_store %arg12[%c3_94, %c0_95, %c0_96], %157 {strides = array<i32>} : memref<4x8x8xf32, #tpu.memory_space<vmem>>, vector<1x8x8xf32>,
    %c3_97 = arith.constant 3 : index
    %c0_98 = arith.constant 0 : index
    %c0_99 = arith.constant 0 : index
    %158 = vector.load %arg10[%c3_97, %c0_98, %c0_99] : memref<4x8x1xf32, #tpu.memory_space<vmem>>, vector<1x8x1xf32>
    %159 = vector.shape_cast %158 : vector<1x8x1xf32> to vector<8x1xf32>
    %160 = vector.shape_cast %134 : vector<8x1xf32> to vector<1x8x1xf32>
    tpu.vector_store %arg10[%c3_97, %c0_98, %c0_99], %160 {strides = array<i32>} : memref<4x8x1xf32, #tpu.memory_space<vmem>>, vector<1x8x1xf32>,
    %c0_i32_100 = arith.constant 0 : i32
    %161 = arith.cmpi eq, %arg2, %c0_i32_100 : i32
    %162 = arith.extui %161 : i1 to i32
    %c0_i32_101 = arith.constant 0 : i32
    %163 = arith.cmpi ne, %162, %c0_i32_101 : i32
    scf.if %163 {
      %c0_102 = arith.constant 0 : index
      %c0_103 = arith.constant 0 : index
      %c0_104 = arith.constant 0 : index
      %164 = vector.load %arg11[%c0_102, %c0_103, %c0_104] : memref<4x8x1xf32, #tpu.memory_space<vmem>>, vector<1x8x1xf32>
      %165 = vector.shape_cast %164 : vector<1x8x1xf32> to vector<8x1xf32>
      %166 = tpu.reciprocal %165 : vector<8x1xf32> -> vector<8x1xf32>
      %c0_105 = arith.constant 0 : index
      %c0_106 = arith.constant 0 : index
      %c0_107 = arith.constant 0 : index
      %167 = vector.load %arg12[%c0_105, %c0_106, %c0_107] : memref<4x8x8xf32, #tpu.memory_space<vmem>>, vector<1x8x8xf32>
      %168 = vector.shape_cast %167 : vector<1x8x8xf32> to vector<8x8xf32>
      %169 = vector.broadcast %166 : vector<8x1xf32> to vector<8x8xf32>
      %170 = arith.mulf %168, %169 : vector<8x8xf32>
      %c0_108 = arith.constant 0 : index
      %c0_109 = arith.constant 0 : index
      %171 = vector.load %arg13[%c0_108, %c0_109] : memref<8x32xf32, #tpu.memory_space<vmem>>, vector<8x8xf32>
      tpu.vector_store %arg13[%c0_108, %c0_109], %170 {strides = array<i32>} : memref<8x32xf32, #tpu.memory_space<vmem>>, vector<8x8xf32>,
      %c1_110 = arith.constant 1 : index
      %c0_111 = arith.constant 0 : index
      %c0_112 = arith.constant 0 : index
      %172 = vector.load %arg11[%c1_110, %c0_111, %c0_112] : memref<4x8x1xf32, #tpu.memory_space<vmem>>, vector<1x8x1xf32>
      %173 = vector.shape_cast %172 : vector<1x8x1xf32> to vector<8x1xf32>
      %174 = tpu.reciprocal %173 : vector<8x1xf32> -> vector<8x1xf32>
      %c1_113 = arith.constant 1 : index
      %c0_114 = arith.constant 0 : index
      %c0_115 = arith.constant 0 : index
      %175 = vector.load %arg12[%c1_113, %c0_114, %c0_115] : memref<4x8x8xf32, #tpu.memory_space<vmem>>, vector<1x8x8xf32>
      %176 = vector.shape_cast %175 : vector<1x8x8xf32> to vector<8x8xf32>
      %177 = vector.broadcast %174 : vector<8x1xf32> to vector<8x8xf32>
      %178 = arith.mulf %176, %177 : vector<8x8xf32>
      %c0_116 = arith.constant 0 : index
      %c8 = arith.constant 8 : index
      %179 = vector.load %arg13[%c0_116, %c8] : memref<8x32xf32, #tpu.memory_space<vmem>>, vector<8x8xf32>
      tpu.vector_store %arg13[%c0_116, %c8], %178 {strides = array<i32>} : memref<8x32xf32, #tpu.memory_space<vmem>>, vector<8x8xf32>,
      %c2_117 = arith.constant 2 : index
      %c0_118 = arith.constant 0 : index
      %c0_119 = arith.constant 0 : index
      %180 = vector.load %arg11[%c2_117, %c0_118, %c0_119] : memref<4x8x1xf32, #tpu.memory_space<vmem>>, vector<1x8x1xf32>
      %181 = vector.shape_cast %180 : vector<1x8x1xf32> to vector<8x1xf32>
      %182 = tpu.reciprocal %181 : vector<8x1xf32> -> vector<8x1xf32>
      %c2_120 = arith.constant 2 : index
      %c0_121 = arith.constant 0 : index
      %c0_122 = arith.constant 0 : index
      %183 = vector.load %arg12[%c2_120, %c0_121, %c0_122] : memref<4x8x8xf32, #tpu.memory_space<vmem>>, vector<1x8x8xf32>
      %184 = vector.shape_cast %183 : vector<1x8x8xf32> to vector<8x8xf32>
      %185 = vector.broadcast %182 : vector<8x1xf32> to vector<8x8xf32>
      %186 = arith.mulf %184, %185 : vector<8x8xf32>
      %c0_123 = arith.constant 0 : index
      %c16 = arith.constant 16 : index
      %187 = vector.load %arg13[%c0_123, %c16] : memref<8x32xf32, #tpu.memory_space<vmem>>, vector<8x8xf32>
      tpu.vector_store %arg13[%c0_123, %c16], %186 {strides = array<i32>} : memref<8x32xf32, #tpu.memory_space<vmem>>, vector<8x8xf32>,
      %c3_124 = arith.constant 3 : index
      %c0_125 = arith.constant 0 : index
      %c0_126 = arith.constant 0 : index
      %188 = vector.load %arg11[%c3_124, %c0_125, %c0_126] : memref<4x8x1xf32, #tpu.memory_space<vmem>>, vector<1x8x1xf32>
      %189 = vector.shape_cast %188 : vector<1x8x1xf32> to vector<8x1xf32>
      %190 = tpu.reciprocal %189 : vector<8x1xf32> -> vector<8x1xf32>
      %c3_127 = arith.constant 3 : index
      %c0_128 = arith.constant 0 : index
      %c0_129 = arith.constant 0 : index
      %191 = vector.load %arg12[%c3_127, %c0_128, %c0_129] : memref<4x8x8xf32, #tpu.memory_space<vmem>>, vector<1x8x8xf32>
      %192 = vector.shape_cast %191 : vector<1x8x8xf32> to vector<8x8xf32>
      %193 = vector.broadcast %190 : vector<8x1xf32> to vector<8x8xf32>
      %194 = arith.mulf %192, %193 : vector<8x8xf32>
      %c0_130 = arith.constant 0 : index
      %c24 = arith.constant 24 : index
      %195 = vector.load %arg13[%c0_130, %c24] : memref<8x32xf32, #tpu.memory_space<vmem>>, vector<8x8xf32>
      tpu.vector_store %arg13[%c0_130, %c24], %194 {strides = array<i32>} : memref<8x32xf32, #tpu.memory_space<vmem>>, vector<8x8xf32>,
      %c0_131 = arith.constant 0 : index
      %c0_132 = arith.constant 0 : index
      %196 = vector.load %arg13[%c0_131, %c0_132] : memref<8x32xf32, #tpu.memory_space<vmem>>, vector<8x32xf32>
      %c0_133 = arith.constant 0 : index
      %c0_134 = arith.constant 0 : index
      %197 = vector.load %arg7[%c0_133, %c0_134] : memref<32x32xf32, #tpu.memory_space<vmem>>, vector<32x32xf32>
      %cst_135 = arith.constant dense<0.000000e+00> : vector<8x32xf32>
      %198 = tpu.matmul %196, %197, %cst_135 {dimension_numbers = #tpu.dot_dimension_numbers<[1], [0], [0], [1], [0, 0, 1, 1], [], []>} : vector<8x32xf32>, vector<32x32xf32>, vector<8x32xf32> -> vector<8x32xf32>
      %c0_136 = arith.constant 0 : index
      %c0_137 = arith.constant 0 : index
      %199 = vector.load %arg8[%c0_136, %c0_137] : memref<1x32xf32, #tpu.memory_space<vmem>>, vector<1x32xf32>
      %200 = vector.broadcast %199 : vector<1x32xf32> to vector<8x32xf32>
      %201 = arith.addf %198, %200 : vector<8x32xf32>
      %c0_138 = arith.constant 0 : index
      %c0_139 = arith.constant 0 : index
      %c0_140 = arith.constant 0 : index
      %202 = vector.load %arg9[%c0_138, %c0_139, %c0_140] : memref<1x8x32xf32, #tpu.memory_space<vmem>>, vector<1x8x32xf32>
      %203 = vector.shape_cast %202 : vector<1x8x32xf32> to vector<8x32xf32>
      %204 = vector.shape_cast %201 : vector<8x32xf32> to vector<1x8x32xf32>
      tpu.vector_store %arg9[%c0_138, %c0_139, %c0_140], %204 {strides = array<i32>} : memref<1x8x32xf32, #tpu.memory_space<vmem>>, vector<1x8x32xf32>,
    } else {
    }
    return
  }
  func.func @transform_0(%arg0: i32, %arg1: i32, %arg2: i32) -> (i32, i32, i32) {
    %c0_i32 = arith.constant 0 : i32
    %c0_i32_0 = arith.constant 0 : i32
    return %arg0, %arg1, %c0_i32 : i32, i32, i32
  }
  func.func @transform_1(%arg0: i32, %arg1: i32, %arg2: i32) -> (i32, i32, i32) {
    %c0_i32 = arith.constant 0 : i32
    %c0_i32_0 = arith.constant 0 : i32
    return %arg0, %arg2, %c0_i32 : i32, i32, i32
  }
  func.func @transform_2(%arg0: i32, %arg1: i32, %arg2: i32) -> (i32, i32, i32) {
    %c0_i32 = arith.constant 0 : i32
    %c0_i32_0 = arith.constant 0 : i32
    return %arg0, %arg2, %c0_i32 : i32, i32, i32
  }
  func.func @transform_3(%arg0: i32, %arg1: i32, %arg2: i32) -> (i32, i32, i32) {
    %c0_i32 = arith.constant 0 : i32
    return %arg0, %arg1, %arg2 : i32, i32, i32
  }
  func.func @transform_4(%arg0: i32, %arg1: i32, %arg2: i32) -> (i32, i32) {
    %c0_i32 = arith.constant 0 : i32
    %c0_i32_0 = arith.constant 0 : i32
    %c0_i32_1 = arith.constant 0 : i32
    return %c0_i32, %c0_i32_0 : i32, i32
  }
  func.func @transform_5(%arg0: i32, %arg1: i32, %arg2: i32) -> (i32, i32) {
    %c0_i32 = arith.constant 0 : i32
    %c0_i32_0 = arith.constant 0 : i32
    %c0_i32_1 = arith.constant 0 : i32
    return %c0_i32, %c0_i32_0 : i32, i32
  }
  func.func @transform_6(%arg0: i32, %arg1: i32, %arg2: i32) -> (i32, i32, i32) {
    %c0_i32 = arith.constant 0 : i32
    %c0_i32_0 = arith.constant 0 : i32
    return %arg0, %arg1, %c0_i32 : i32, i32, i32
  }
}

</mosaic_0001>

<llo_original>
// kernel: multi_head_attention.2
$region0: #{multi_head_attention.2}
  #allocation0 [shape = 'u32[]', space=smem, size = 0x4, offset = 0x4, fixed_abs, tag = 'smem constant byte address 0x4 - core index']
  #allocation1 [shape = 'u32[144,128]{1,0:T(1,128)}', space=vmem, size = 0x12000, scoped, tag = 'internal scratch']
  %s0 = inlined_call_operand.vmem [shape: f32[2,8,32], index: 0, kind: input, shape index: {}]
  %s1 = inlined_call_operand.vmem [shape: f32[2,8,32], index: 1, kind: input, shape index: {}]
  %s2 = inlined_call_operand.vmem [shape: f32[2,8,32], index: 2, kind: input, shape index: {}]
  %s3 = inlined_call_operand.vmem [shape: f32[32,32], index: 3, kind: input, shape index: {}]
  %s4 = inlined_call_operand.vmem [shape: f32[1,32], index: 4, kind: input, shape index: {}]
  %s5 = inlined_call_operand.vmem [shape: f32[32,32], index: 5, kind: input, shape index: {}]
  %s6 = inlined_call_operand.vmem [shape: f32[1,32], index: 6, kind: input, shape index: {}]
  %s7 = inlined_call_operand.vmem [shape: f32[32,32], index: 7, kind: input, shape index: {}]
  %s8 = inlined_call_operand.vmem [shape: f32[1,32], index: 8, kind: input, shape index: {}]
  %s9 = inlined_call_operand.vmem [shape: f32[2,8,32], index: 9, kind: output, shape index: {0}]
  %s10 = inlined_call_operand.vmem [shape: f32[2,8,32], index: 10, kind: output, shape index: {1}]
  %s11 = inlined_call_operand.vmem [shape: f32[2,8,32], index: 11, kind: output, shape index: {2}]
  %12 = xla_tuple %s9, %s10, %s11
  %s13 = sld [smem:[#allocation0]]
  $region85: #{multi_head_attention.2} parent=0
    _
  %s15 = ssub.s32 1, %s13
  %s16 = scalar_select 0, %s15, %s13
  loop: start=0, step=1, limit=4
  $region2: #{multi_head_attention.2} parent=0 // loop_pre_header
    _
  $region3: #{multi_head_attention.2} parent=0 // loop_header
    %s18 = sphi 0, %s22
    %p19 = scmp.ge.s32.totalorder %s18, 4
    %s25 = sphi 0, %s37
    %s26 = sphi 0, %s33
    %s27 = sphi 0, %s25
    %s28 = sphi 0, %s26
    %s29 = sphi 0, %s27
    %s30 = sphi 0, %s28
    %s42 = sphi 0, %s44
    %s45 = sphi 0, %s42
    %s46 = sphi 0, %s45
    %s62 = sphi 0, %s46
    %s70 = sphi 0, %s72
    %s73 = sphi 0, %s70
    %s74 = sphi 0, %s73
    %s90 = sphi 0, %s74
    %s98 = sphi 0, %s100
    %s101 = sphi 0, %s98
    %s102 = sphi 0, %s101
    %s118 = sphi 0, %s102
    %s122 = sphi 0, %s122
    %s124 = sphi 0, %s122
    %s125 = sphi 0, %s124
    %s139 = sphi 0, %s125
    %s143 = sphi 0, %s143
    %s145 = sphi 0, %s143
    %s146 = sphi 0, %s145
    %s160 = sphi 0, %s146
    %s164 = sphi 0, %s164
    %s166 = sphi 0, %s164
    %s167 = sphi 0, %s166
    %s181 = sphi 0, %s167
    %s185 = sphi 0, %s185
    %s187 = sphi 0, %s185
    %s188 = sphi 0, %s187
    %s202 = sphi 0, %s188
    %s206 = sphi 0, %s206
    %s208 = sphi 0, %s206
    %s209 = sphi 0, %s208
    %s223 = sphi 0, %s209
    %s227 = sphi 0, %s227
    %s229 = sphi 0, %s227
    %s230 = sphi 0, %s229
    %s244 = sphi 0, %s230
    %s252 = sphi 0, %s254
    %s255 = sphi 0, %s252
    %s256 = sphi 0, %s255
    %s272 = sphi 0, %s256
    %s280 = sphi 0, %s282
    %s283 = sphi 0, %s280
    %s284 = sphi 0, %s283
    %s300 = sphi 0, %s284
    %s308 = sphi 0, %s310
    %s311 = sphi 0, %s308
    %s312 = sphi 0, %s311
    %s328 = sphi 0, %s312
  $region4: #{multi_head_attention.2} parent=0 // loop_header_branch
    %21 = sbr.rel (%p19) target = $region8
  $region5: #{multi_head_attention.2} parent=0 // loop_body
    %s23 = ssub.s32 %s18, 1
    %s24 = ssub.s32 %s18, 2
    %s31 = sadd.s32 1, %s26
    %p32 = scmp.ge.s32.totalorder %s31, 1
    %s33 = scalar_select %p32, 0, %s31
    %s34 = sadd.s32 1, %s25
    %s35 = scalar_select %p32, %s34, %s25
    %p36 = scmp.ge.s32.totalorder %s35, 2
    %s37 = scalar_select %p36, 0, %s35
    %s38 = ssub.s32 %s25, %s37
    %s39 = ssub.s32 %s26, %s33
    %s40 = sor.u32 %s38, %s39
    %p41 = scmp.eq.s32.totalorder %s40, 0
    %s43 = sadd.s32 %s42, 1
    %s44 = scalar_select %p41, %s42, %s43
    %p47 = pneg %p41
    %p48 = scmp.eq.s32.totalorder %s18, 1
    %p49 = por %p47, %p48
    %p50 = scmp.ne.s32.totalorder %s42, %s45
    %p51 = scmp.eq.s32.totalorder %s18, 0
    %p52 = por %p50, %p51
    %p53 = scmp.ne.s32.totalorder %s42, %s45
    %p54 = scmp.eq.s32.totalorder %s23, 1
    %p55 = por %p53, %p54
    %p56 = scmp.ne.s32.totalorder %s45, %s46
    %p57 = scmp.eq.s32.totalorder %s23, 0
    %p58 = por %p56, %p57
    %p59 = scmp.ne.s32.totalorder %s45, %s46
    %p60 = scmp.eq.s32.totalorder %s24, 1
    %p61 = por %p59, %p60
    %p63 = scmp.ne.s32.totalorder %s46, %s62
    %p64 = scmp.eq.s32.totalorder %s24, 0
    %p65 = por %p63, %p64
    %s66 = ssub.s32 %s25, %s37
    %s67 = ssub.s32 %s26, %s33
    %s68 = sor.u32 %s66, %s67
    %p69 = scmp.eq.s32.totalorder %s68, 0
    %s71 = sadd.s32 %s70, 1
    %s72 = scalar_select %p69, %s70, %s71
    %p75 = pneg %p69
    %p76 = scmp.eq.s32.totalorder %s18, 1
    %p77 = por %p75, %p76
    %p78 = scmp.ne.s32.totalorder %s70, %s73
    %p79 = scmp.eq.s32.totalorder %s18, 0
    %p80 = por %p78, %p79
    %p81 = scmp.ne.s32.totalorder %s70, %s73
    %p82 = scmp.eq.s32.totalorder %s23, 1
    %p83 = por %p81, %p82
    %p84 = scmp.ne.s32.totalorder %s73, %s74
    %p85 = scmp.eq.s32.totalorder %s23, 0
    %p86 = por %p84, %p85
    %p87 = scmp.ne.s32.totalorder %s73, %s74
    %p88 = scmp.eq.s32.totalorder %s24, 1
    %p89 = por %p87, %p88
    %p91 = scmp.ne.s32.totalorder %s74, %s90
    %p92 = scmp.eq.s32.totalorder %s24, 0
    %p93 = por %p91, %p92
    %s94 = ssub.s32 %s25, %s37
    %s95 = ssub.s32 %s26, %s33
    %s96 = sor.u32 %s94, %s95
    %p97 = scmp.eq.s32.totalorder %s96, 0
    %s99 = sadd.s32 %s98, 1
    %s100 = scalar_select %p97, %s98, %s99
    %p103 = pneg %p97
    %p104 = scmp.eq.s32.totalorder %s18, 1
    %p105 = por %p103, %p104
    %p106 = scmp.ne.s32.totalorder %s98, %s101
    %p107 = scmp.eq.s32.totalorder %s18, 0
    %p108 = por %p106, %p107
    %p109 = scmp.ne.s32.totalorder %s98, %s101
    %p110 = scmp.eq.s32.totalorder %s23, 1
    %p111 = por %p109, %p110
    %p112 = scmp.ne.s32.totalorder %s101, %s102
    %p113 = scmp.eq.s32.totalorder %s23, 0
    %p114 = por %p112, %p113
    %p115 = scmp.ne.s32.totalorder %s101, %s102
    %p116 = scmp.eq.s32.totalorder %s24, 1
    %p117 = por %p115, %p116
    %p119 = scmp.ne.s32.totalorder %s102, %s118
    %p120 = scmp.eq.s32.totalorder %s24, 0
    %p121 = por %p119, %p120
    %s123 = sadd.s32 %s122, 1
    %p126 = scmp.eq.s32.totalorder %s18, 1
    %p127 = scmp.ne.s32.totalorder %s122, %s124
    %p128 = scmp.eq.s32.totalorder %s18, 0
    %p129 = por %p127, %p128
    %p130 = scmp.ne.s32.totalorder %s122, %s124
    %p131 = scmp.eq.s32.totalorder %s23, 1
    %p132 = por %p130, %p131
    %p133 = scmp.ne.s32.totalorder %s124, %s125
    %p134 = scmp.eq.s32.totalorder %s23, 0
    %p135 = por %p133, %p134
    %p136 = scmp.ne.s32.totalorder %s124, %s125
    %p137 = scmp.eq.s32.totalorder %s24, 1
    %p138 = por %p136, %p137
    %p140 = scmp.ne.s32.totalorder %s125, %s139
    %p141 = scmp.eq.s32.totalorder %s24, 0
    %p142 = por %p140, %p141
    %s144 = sadd.s32 %s143, 1
    %p147 = scmp.eq.s32.totalorder %s18, 1
    %p148 = scmp.ne.s32.totalorder %s143, %s145
    %p149 = scmp.eq.s32.totalorder %s18, 0
    %p150 = por %p148, %p149
    %p151 = scmp.ne.s32.totalorder %s143, %s145
    %p152 = scmp.eq.s32.totalorder %s23, 1
    %p153 = por %p151, %p152
    %p154 = scmp.ne.s32.totalorder %s145, %s146
    %p155 = scmp.eq.s32.totalorder %s23, 0
    %p156 = por %p154, %p155
    %p157 = scmp.ne.s32.totalorder %s145, %s146
    %p158 = scmp.eq.s32.totalorder %s24, 1
    %p159 = por %p157, %p158
    %p161 = scmp.ne.s32.totalorder %s146, %s160
    %p162 = scmp.eq.s32.totalorder %s24, 0
    %p163 = por %p161, %p162
    %s165 = sadd.s32 %s164, 1
    %p168 = scmp.eq.s32.totalorder %s18, 1
    %p169 = scmp.ne.s32.totalorder %s164, %s166
    %p170 = scmp.eq.s32.totalorder %s18, 0
    %p171 = por %p169, %p170
    %p172 = scmp.ne.s32.totalorder %s164, %s166
    %p173 = scmp.eq.s32.totalorder %s23, 1
    %p174 = por %p172, %p173
    %p175 = scmp.ne.s32.totalorder %s166, %s167
    %p176 = scmp.eq.s32.totalorder %s23, 0
    %p177 = por %p175, %p176
    %p178 = scmp.ne.s32.totalorder %s166, %s167
    %p179 = scmp.eq.s32.totalorder %s24, 1
    %p180 = por %p178, %p179
    %p182 = scmp.ne.s32.totalorder %s167, %s181
    %p183 = scmp.eq.s32.totalorder %s24, 0
    %p184 = por %p182, %p183
    %s186 = sadd.s32 %s185, 1
    %p189 = scmp.eq.s32.totalorder %s18, 1
    %p190 = scmp.ne.s32.totalorder %s185, %s187
    %p191 = scmp.eq.s32.totalorder %s18, 0
    %p192 = por %p190, %p191
    %p193 = scmp.ne.s32.totalorder %s185, %s187
    %p194 = scmp.eq.s32.totalorder %s23, 1
    %p195 = por %p193, %p194
    %p196 = scmp.ne.s32.totalorder %s187, %s188
    %p197 = scmp.eq.s32.totalorder %s23, 0
    %p198 = por %p196, %p197
    %p199 = scmp.ne.s32.totalorder %s187, %s188
    %p200 = scmp.eq.s32.totalorder %s24, 1
    %p201 = por %p199, %p200
    %p203 = scmp.ne.s32.totalorder %s188, %s202
    %p204 = scmp.eq.s32.totalorder %s24, 0
    %p205 = por %p203, %p204
    %s207 = sadd.s32 %s206, 1
    %p210 = scmp.eq.s32.totalorder %s18, 1
    %p211 = scmp.ne.s32.totalorder %s206, %s208
    %p212 = scmp.eq.s32.totalorder %s18, 0
    %p213 = por %p211, %p212
    %p214 = scmp.ne.s32.totalorder %s206, %s208
    %p215 = scmp.eq.s32.totalorder %s23, 1
    %p216 = por %p214, %p215
    %p217 = scmp.ne.s32.totalorder %s208, %s209
    %p218 = scmp.eq.s32.totalorder %s23, 0
    %p219 = por %p217, %p218
    %p220 = scmp.ne.s32.totalorder %s208, %s209
    %p221 = scmp.eq.s32.totalorder %s24, 1
    %p222 = por %p220, %p221
    %p224 = scmp.ne.s32.totalorder %s209, %s223
    %p225 = scmp.eq.s32.totalorder %s24, 0
    %p226 = por %p224, %p225
    %s228 = sadd.s32 %s227, 1
    %p231 = scmp.eq.s32.totalorder %s18, 1
    %p232 = scmp.ne.s32.totalorder %s227, %s229
    %p233 = scmp.eq.s32.totalorder %s18, 0
    %p234 = por %p232, %p233
    %p235 = scmp.ne.s32.totalorder %s227, %s229
    %p236 = scmp.eq.s32.totalorder %s23, 1
    %p237 = por %p235, %p236
    %p238 = scmp.ne.s32.totalorder %s229, %s230
    %p239 = scmp.eq.s32.totalorder %s23, 0
    %p240 = por %p238, %p239
    %p241 = scmp.ne.s32.totalorder %s229, %s230
    %p242 = scmp.eq.s32.totalorder %s24, 1
    %p243 = por %p241, %p242
    %p245 = scmp.ne.s32.totalorder %s230, %s244
    %p246 = scmp.eq.s32.totalorder %s24, 0
    %p247 = por %p245, %p246
    %s248 = ssub.s32 %s25, %s37
    %s249 = ssub.s32 %s26, %s33
    %s250 = sor.u32 %s248, %s249
    %p251 = scmp.eq.s32.totalorder %s250, 0
    %s253 = sadd.s32 %s252, 1
    %s254 = scalar_select %p251, %s252, %s253
    %p257 = pneg %p251
    %p258 = scmp.eq.s32.totalorder %s18, 1
    %p259 = por %p257, %p258
    %p260 = scmp.ne.s32.totalorder %s252, %s255
    %p261 = scmp.eq.s32.totalorder %s18, 0
    %p262 = por %p260, %p261
    %p263 = scmp.ne.s32.totalorder %s252, %s255
    %p264 = scmp.eq.s32.totalorder %s23, 1
    %p265 = por %p263, %p264
    %p266 = scmp.ne.s32.totalorder %s255, %s256
    %p267 = scmp.eq.s32.totalorder %s23, 0
    %p268 = por %p266, %p267
    %p269 = scmp.ne.s32.totalorder %s255, %s256
    %p270 = scmp.eq.s32.totalorder %s24, 1
    %p271 = por %p269, %p270
    %p273 = scmp.ne.s32.totalorder %s256, %s272
    %p274 = scmp.eq.s32.totalorder %s24, 0
    %p275 = por %p273, %p274
    %s276 = ssub.s32 %s25, %s37
    %s277 = ssub.s32 %s26, %s33
    %s278 = sor.u32 %s276, %s277
    %p279 = scmp.eq.s32.totalorder %s278, 0
    %s281 = sadd.s32 %s280, 1
    %s282 = scalar_select %p279, %s280, %s281
    %p285 = pneg %p279
    %p286 = scmp.eq.s32.totalorder %s18, 1
    %p287 = por %p285, %p286
    %p288 = scmp.ne.s32.totalorder %s280, %s283
    %p289 = scmp.eq.s32.totalorder %s18, 0
    %p290 = por %p288, %p289
    %p291 = scmp.ne.s32.totalorder %s280, %s283
    %p292 = scmp.eq.s32.totalorder %s23, 1
    %p293 = por %p291, %p292
    %p294 = scmp.ne.s32.totalorder %s283, %s284
    %p295 = scmp.eq.s32.totalorder %s23, 0
    %p296 = por %p294, %p295
    %p297 = scmp.ne.s32.totalorder %s283, %s284
    %p298 = scmp.eq.s32.totalorder %s24, 1
    %p299 = por %p297, %p298
    %p301 = scmp.ne.s32.totalorder %s284, %s300
    %p302 = scmp.eq.s32.totalorder %s24, 0
    %p303 = por %p301, %p302
    %s304 = ssub.s32 %s25, %s37
    %s305 = ssub.s32 %s26, %s33
    %s306 = sor.u32 %s304, %s305
    %p307 = scmp.eq.s32.totalorder %s306, 0
    %s309 = sadd.s32 %s308, 1
    %s310 = scalar_select %p307, %s308, %s309
    %p313 = pneg %p307
    %p314 = scmp.eq.s32.totalorder %s18, 1
    %p315 = por %p313, %p314
    %p316 = scmp.ne.s32.totalorder %s308, %s311
    %p317 = scmp.eq.s32.totalorder %s18, 0
    %p318 = por %p316, %p317
    %p319 = scmp.ne.s32.totalorder %s308, %s311
    %p320 = scmp.eq.s32.totalorder %s23, 1
    %p321 = por %p319, %p320
    %p322 = scmp.ne.s32.totalorder %s311, %s312
    %p323 = scmp.eq.s32.totalorder %s23, 0
    %p324 = por %p322, %p323
    %p325 = scmp.ne.s32.totalorder %s311, %s312
    %p326 = scmp.eq.s32.totalorder %s24, 1
    %p327 = por %p325, %p326
    %p329 = scmp.ne.s32.totalorder %s312, %s328
    %p330 = scmp.eq.s32.totalorder %s24, 0
    %p331 = por %p329, %p330
    %p332 = scmp.le.s32.totalorder 1, %s18
    %p333 = scmp.lt.s32.totalorder %s18, 3
    %p334 = pnand %p332, %p333
    %p335 = pneg %p334
    // Predicated region
    $region9: #{multi_head_attention.2} parent=5 // pred_check
      _
    $region10: #{multi_head_attention.2} parent=5 // pred_check_branch
      %337 = sbr.rel (%p334) target = $region12
    $region11: #{multi_head_attention.2} parent=5 // pred_region
      %s338 = ssub.s32 %s18, 1
      // Predicated region
      $region13: #{multi_head_attention.2} parent=11 // pred_check
        %p339 = pneg %p135
      $region14: #{multi_head_attention.2} parent=11 // pred_check_branch
        %341 = sbr.rel (%p339) target = $region16
      $region15: #{multi_head_attention.2} parent=11 // pred_region
        _
      $region16: #{multi_head_attention.2} parent=11 // pred_fallthru
        _
      // Predicated region
      $region17: #{multi_head_attention.2} parent=11 // pred_check
        %p342 = pneg %p156
      $region18: #{multi_head_attention.2} parent=11 // pred_check_branch
        %344 = sbr.rel (%p342) target = $region20
      $region19: #{multi_head_attention.2} parent=11 // pred_region
        _
      $region20: #{multi_head_attention.2} parent=11 // pred_fallthru
        _
      // Predicated region
      $region21: #{multi_head_attention.2} parent=11 // pred_check
        %p345 = pneg %p177
      $region22: #{multi_head_attention.2} parent=11 // pred_check_branch
        %347 = sbr.rel (%p345) target = $region24
      $region23: #{multi_head_attention.2} parent=11 // pred_region
        _
      $region24: #{multi_head_attention.2} parent=11 // pred_fallthru
        _
      // Predicated region
      $region25: #{multi_head_attention.2} parent=11 // pred_check
        %p348 = pneg %p198
      $region26: #{multi_head_attention.2} parent=11 // pred_check_branch
        %350 = sbr.rel (%p348) target = $region28
      $region27: #{multi_head_attention.2} parent=11 // pred_region
        _
      $region28: #{multi_head_attention.2} parent=11 // pred_fallthru
        _
      // Predicated region
      $region29: #{multi_head_attention.2} parent=11 // pred_check
        %p351 = pneg %p219
      $region30: #{multi_head_attention.2} parent=11 // pred_check_branch
        %353 = sbr.rel (%p351) target = $region32
      $region31: #{multi_head_attention.2} parent=11 // pred_region
        _
      $region32: #{multi_head_attention.2} parent=11 // pred_fallthru
        _
      // Predicated region
      $region33: #{multi_head_attention.2} parent=11 // pred_check
        %p354 = pneg %p240
      $region34: #{multi_head_attention.2} parent=11 // pred_check_branch
        %356 = sbr.rel (%p354) target = $region36
      $region35: #{multi_head_attention.2} parent=11 // pred_region
        _
      $region36: #{multi_head_attention.2} parent=11 // pred_fallthru
        _
    $region12: #{multi_head_attention.2} parent=5 // pred_fallthru
      _
    %p357 = scmp.lt.s32.totalorder %s18, 2
    // Predicated region
    $region37: #{multi_head_attention.2} parent=5 // pred_check
      %p358 = pneg %p357
    $region38: #{multi_head_attention.2} parent=5 // pred_check_branch
      %360 = sbr.rel (%p358) target = $region40
    $region39: #{multi_head_attention.2} parent=5 // pred_region
      // Predicated region
      $region41: #{multi_head_attention.2} parent=39 // pred_check
        %p361 = pneg %p52
      $region42: #{multi_head_attention.2} parent=39 // pred_check_branch
        %363 = sbr.rel (%p361) target = $region44
      $region43: #{multi_head_attention.2} parent=39 // pred_region
        %p364 = scmp.lt.s32.totalorder %s25, 1
        %s365 = scalar_select %p364, %s25, 1
        %p366 = scmp.lt.s32.totalorder %s26, 0
        %s367 = scalar_select %p366, %s26, 0
        %s368 = sadd.s32 %s367, %s365
        %s369 = smul.addr %s368, 8
        %s370 = scalar_lea.vmem %s0, %s369
      $region44: #{multi_head_attention.2} parent=39 // pred_fallthru
        _
      // Predicated region
      $region45: #{multi_head_attention.2} parent=39 // pred_check
        %p371 = pneg %p80
      $region46: #{multi_head_attention.2} parent=39 // pred_check_branch
        %373 = sbr.rel (%p371) target = $region48
      $region47: #{multi_head_attention.2} parent=39 // pred_region
        %p374 = scmp.lt.s32.totalorder %s25, 1
        %s375 = scalar_select %p374, %s25, 1
        %p376 = scmp.lt.s32.totalorder %s26, 0
        %s377 = scalar_select %p376, %s26, 0
        %s378 = sadd.s32 %s377, %s375
        %s379 = smul.addr %s378, 8
        %s380 = scalar_lea.vmem %s1, %s379
      $region48: #{multi_head_attention.2} parent=39 // pred_fallthru
        _
      // Predicated region
      $region49: #{multi_head_attention.2} parent=39 // pred_check
        %p381 = pneg %p108
      $region50: #{multi_head_attention.2} parent=39 // pred_check_branch
        %383 = sbr.rel (%p381) target = $region52
      $region51: #{multi_head_attention.2} parent=39 // pred_region
        %p384 = scmp.lt.s32.totalorder %s25, 1
        %s385 = scalar_select %p384, %s25, 1
        %p386 = scmp.lt.s32.totalorder %s26, 0
        %s387 = scalar_select %p386, %s26, 0
        %s388 = sadd.s32 %s387, %s385
        %s389 = smul.addr %s388, 8
        %s390 = scalar_lea.vmem %s2, %s389
      $region52: #{multi_head_attention.2} parent=39 // pred_fallthru
        _
    $region40: #{multi_head_attention.2} parent=5 // pred_fallthru
      _
    %p391 = scmp.le.s32.totalorder 1, %s18
    %p392 = scmp.lt.s32.totalorder %s18, 3
    %p393 = pnand %p391, %p392
    %p394 = pneg %p393
    // Predicated region
    $region53: #{multi_head_attention.2} parent=5 // pred_check
      _
    $region54: #{multi_head_attention.2} parent=5 // pred_check_branch
      %396 = sbr.rel (%p393) target = $region56
    $region55: #{multi_head_attention.2} parent=5 // pred_region
      %s397 = ssub.s32 %s18, 1
      %p398 = scmp.lt.s32.totalorder %s27, 1
      %s399 = scalar_select %p398, %s27, 1
      %p400 = scmp.lt.s32.totalorder %s28, 0
      %s401 = scalar_select %p400, %s28, 0
      %s402 = sadd.s32 %s401, %s399
      %s403 = smul.addr %s402, 8
      %s404 = scalar_lea.vmem %s0, %s403
      %p405 = pneg %p58
      %p406 = pneg %p55
      %p407 = scmp.lt.s32.totalorder %s27, 1
      %s408 = scalar_select %p407, %s27, 1
      %p409 = scmp.lt.s32.totalorder %s28, 0
      %s410 = scalar_select %p409, %s28, 0
      %s411 = sadd.s32 %s410, %s408
      %s412 = smul.addr %s411, 8
      %s413 = scalar_lea.vmem %s1, %s412
      %p414 = pneg %p86
      %p415 = pneg %p83
      %p416 = scmp.lt.s32.totalorder %s27, 1
      %s417 = scalar_select %p416, %s27, 1
      %p418 = scmp.lt.s32.totalorder %s28, 0
      %s419 = scalar_select %p418, %s28, 0
      %s420 = sadd.s32 %s419, %s417
      %s421 = smul.addr %s420, 8
      %s422 = scalar_lea.vmem %s2, %s421
      %p423 = pneg %p114
      %p424 = pneg %p111
      %p425 = pneg %p135
      %p426 = pneg %p132
      %p427 = pneg %p156
      %p428 = pneg %p153
      %p429 = pneg %p177
      %p430 = pneg %p174
      %p431 = pneg %p198
      %p432 = pneg %p195
      %p433 = pneg %p219
      %p434 = pneg %p216
      %p435 = pneg %p240
      %p436 = pneg %p237
      %p437 = pneg %p268
      %p438 = pneg %p265
      %p439 = scmp.lt.s32.totalorder %s27, 1
      %s440 = scalar_select %p439, %s27, 1
      %p441 = scmp.lt.s32.totalorder %s28, 0
      %s442 = scalar_select %p441, %s28, 0
      %s443 = sadd.s32 %s442, %s440
      %s444 = smul.addr %s443, 8
      %s445 = scalar_lea.vmem %s9, %s444
      %p446 = pneg %p296
      %p447 = pneg %p293
      %p448 = scmp.lt.s32.totalorder %s27, 1
      %s449 = scalar_select %p448, %s27, 1
      %p450 = scmp.lt.s32.totalorder %s28, 0
      %s451 = scalar_select %p450, %s28, 0
      %s452 = sadd.s32 %s451, %s449
      %s453 = smul.addr %s452, 8
      %s454 = scalar_lea.vmem %s10, %s453
      %p455 = pneg %p324
      %p456 = pneg %p321
      %p457 = scmp.lt.s32.totalorder %s27, 1
      %s458 = scalar_select %p457, %s27, 1
      %p459 = scmp.lt.s32.totalorder %s28, 0
      %s460 = scalar_select %p459, %s28, 0
      %s461 = sadd.s32 %s460, %s458
      %s462 = smul.addr %s461, 8
      %s463 = scalar_lea.vmem %s11, %s462
      %p464 = scmp.lt.s32.totalorder %s27, 1
      %s465 = scalar_select %p464, %s27, 1
      %p466 = scmp.lt.s32.totalorder %s28, 0
      %s467 = scalar_select %p466, %s28, 0
      %s468 = sadd.s32 %s467, %s465
      %s469 = smul.addr %s468, 8
      %s470 = scalar_lea.vmem %s0, %s469
      %p471 = scmp.lt.s32.totalorder %s27, 1
      %s472 = scalar_select %p471, %s27, 1
      %p473 = scmp.lt.s32.totalorder %s28, 0
      %s474 = scalar_select %p473, %s28, 0
      %s475 = sadd.s32 %s474, %s472
      %s476 = smul.addr %s475, 8
      %s477 = scalar_lea.vmem %s1, %s476
      %p478 = scmp.lt.s32.totalorder %s27, 1
      %s479 = scalar_select %p478, %s27, 1
      %p480 = scmp.lt.s32.totalorder %s28, 0
      %s481 = scalar_select %p480, %s28, 0
      %s482 = sadd.s32 %s481, %s479
      %s483 = smul.addr %s482, 8
      %s484 = scalar_lea.vmem %s2, %s483
      %p485 = scmp.lt.s32.totalorder %s27, 1
      %s486 = scalar_select %p485, %s27, 1
      %p487 = scmp.lt.s32.totalorder %s28, 0
      %s488 = scalar_select %p487, %s28, 0
      %s489 = sadd.s32 %s488, %s486
      %s490 = smul.addr %s489, 8
      %s491 = scalar_lea.vmem %s9, %s490
      %p492 = scmp.lt.s32.totalorder %s27, 1
      %s493 = scalar_select %p492, %s27, 1
      %p494 = scmp.lt.s32.totalorder %s28, 0
      %s495 = scalar_select %p494, %s28, 0
      %s496 = sadd.s32 %s495, %s493
      %s497 = smul.addr %s496, 8
      %s498 = scalar_lea.vmem %s10, %s497
      %p499 = scmp.lt.s32.totalorder %s27, 1
      %s500 = scalar_select %p499, %s27, 1
      %p501 = scmp.lt.s32.totalorder %s28, 0
      %s502 = scalar_select %p501, %s28, 0
      %s503 = sadd.s32 %s502, %s500
      %s504 = smul.addr %s503, 8
      %s505 = scalar_lea.vmem %s11, %s504
      %v506 = vld [vmem:[%s470] sm:$0xff]
      %v507 = vld [vmem:[%s477] sm:$0xff]
      %v508 = vld [vmem:[%s484] sm:$0xff]
      %v509 = vld [vmem:[%s3] sm:$0xff]
      %v510 = vld [vmem:[%s3 + $0x8] sm:$0xff]
      %v511 = vld [vmem:[%s3 + $0x10] sm:$0xff]
      %v512 = vld [vmem:[%s3 + $0x18] sm:$0xff]
      %v513 = vld [vmem:[%s4] sm:$0x1]
      %v515 = vlaneseq
      %v516 = vshrl.u32 %v515, 7
      %v517 = vsub.s32 0, %v516
      %v518 = vrot.slane %v513, %v517
      %vm520 = vcmask 261120
      %v522 = vsel %vm520, %v506, 0
      %524 = vmatprep.subr.mxu0 0.0
      %525 = vmatpush1.msra.mxu0 %v509
      %526 = vmatprep.subr.mxu0 0.0
      %527 = vmatpush1.msra.mxu0 %v510
      %528 = vmatprep.subr.mxu0 0.0
      %529 = vmatpush1.msra.mxu0 %v511
      %530 = vmatprep.subr.mxu0 0.0
      %531 = vmatpush1.msra.mxu0 %v512
      %532 = vmatprep.subr.mxu0 0.0
      %533 = vmatpush1.msra.mxu0 0.0
      %534 = vmatprep.subr.mxu0 0.0
      %535 = vmatpush1.msra.mxu0 0.0
      %536 = vmatprep.subr.mxu0 0.0
      %537 = vmatpush1.msra.mxu0 0.0
      %538 = vmatprep.subr.mxu0 0.0
      %539 = vmatpush1.msra.mxu0 0.0
      %540 = vmatprep.subr.mxu0 0.0
      %541 = vmatpush1.msra.mxu0 0.0
      %542 = vmatprep.subr.mxu0 0.0
      %543 = vmatpush1.msra.mxu0 0.0
      %544 = vmatprep.subr.mxu0 0.0
      %545 = vmatpush1.msra.mxu0 0.0
      %546 = vmatprep.subr.mxu0 0.0
      %547 = vmatpush1.msra.mxu0 0.0
      %548 = vmatprep.subr.mxu0 0.0
      %549 = vmatpush1.msra.mxu0 0.0
      %550 = vmatprep.subr.mxu0 0.0
      %551 = vmatpush1.msra.mxu0 0.0
      %552 = vmatprep.subr.mxu0 0.0
      %553 = vmatpush1.msra.mxu0 0.0
      %554 = vmatprep.subr.mxu0 0.0
      %555 = vmatpush1.msra.mxu0 0.0
      %556 = vmatprep.subr.mxu0 0.0
      %557 = vmatpush1.msra.mxu0 0.0
      %558 = vmatprep.subr.mxu0 0.0
      %559 = vmatpush1.msra.mxu0 0.0
      %560 = vmatprep.subr.mxu0 0.0
      %561 = vmatpush1.msra.mxu0 0.0
      %562 = vmatprep.subr.mxu0 0.0
      %563 = vmatpush1.msra.mxu0 0.0
      %564 = vmatprep.subr.mxu0 0.0
      %565 = vmatpush1.msra.mxu0 0.0
      %566 = vmatprep.subr.mxu0 0.0
      %567 = vmatpush1.msra.mxu0 0.0
      %568 = vmatprep.subr.mxu0 0.0
      %569 = vmatpush1.msra.mxu0 0.0
      %570 = vmatprep.subr.mxu0 0.0
      %571 = vmatpush1.msra.mxu0 0.0
      %572 = vmatprep.subr.mxu0 0.0
      %573 = vmatpush1.msra.mxu0 0.0
      %574 = vmatprep.subr.mxu0 0.0
      %575 = vmatpush1.msra.mxu0 0.0
      %576 = vmatprep.subr.mxu0 0.0
      %577 = vmatpush1.msra.mxu0 0.0
      %578 = vmatprep.subr.mxu0 0.0
      %579 = vmatpush1.msra.mxu0 0.0
      %580 = vmatprep.subr.mxu0 0.0
      %581 = vmatpush1.msra.mxu0 0.0
      %582 = vmatprep.subr.mxu0 0.0
      %583 = vmatpush1.msra.mxu0 0.0
      %584 = vmatprep.subr.mxu0 0.0
      %585 = vmatpush1.msra.mxu0 0.0
      %586 = vmatprep.subr.mxu0 0.0
      %587 = vmatpush1.msra.mxu0 0.0
      %588 = vmatprep.mubr.f32.mxu0 0.0
      %589 = vmatmul.mubr.f32.gmra.mrb[0].mxu0 %v522
      %v590 = vpop.f32.mrb[0].mxu0
      %v591 = vadd.f32 %v518, %v590
      %v592 = vpop.f32.mrb[0].mxu0
      %593 = vdwg.mxu0
      %v594 = vmul.f32 %v591, 0.35355338
      %595 = vst.msk [vmem:[%s491] sm:$0xff] %vm520, %v594
      %v596 = vld [vmem:[%s5] sm:$0xff]
      %v597 = vld [vmem:[%s5 + $0x8] sm:$0xff]
      %v598 = vld [vmem:[%s5 + $0x10] sm:$0xff]
      %v599 = vld [vmem:[%s5 + $0x18] sm:$0xff]
      %v600 = vld [vmem:[%s6] sm:$0x1]
      %v602 = vlaneseq
      %v603 = vshrl.u32 %v602, 7
      %v604 = vsub.s32 0, %v603
      %v605 = vrot.slane %v600, %v604
      %v608 = vsel %vm520, %v507, 0
      %610 = vmatprep.subr.mxu0 0.0
      %611 = vmatpush1.msra.mxu0 %v596
      %612 = vmatprep.subr.mxu0 0.0
      %613 = vmatpush1.msra.mxu0 %v597
      %614 = vmatprep.subr.mxu0 0.0
      %615 = vmatpush1.msra.mxu0 %v598
      %616 = vmatprep.subr.mxu0 0.0
      %617 = vmatpush1.msra.mxu0 %v599
      %618 = vmatprep.subr.mxu0 0.0
      %619 = vmatpush1.msra.mxu0 0.0
      %620 = vmatprep.subr.mxu0 0.0
      %621 = vmatpush1.msra.mxu0 0.0
      %622 = vmatprep.subr.mxu0 0.0
      %623 = vmatpush1.msra.mxu0 0.0
      %624 = vmatprep.subr.mxu0 0.0
      %625 = vmatpush1.msra.mxu0 0.0
      %626 = vmatprep.subr.mxu0 0.0
      %627 = vmatpush1.msra.mxu0 0.0
      %628 = vmatprep.subr.mxu0 0.0
      %629 = vmatpush1.msra.mxu0 0.0
      %630 = vmatprep.subr.mxu0 0.0
      %631 = vmatpush1.msra.mxu0 0.0
      %632 = vmatprep.subr.mxu0 0.0
      %633 = vmatpush1.msra.mxu0 0.0
      %634 = vmatprep.subr.mxu0 0.0
      %635 = vmatpush1.msra.mxu0 0.0
      %636 = vmatprep.subr.mxu0 0.0
      %637 = vmatpush1.msra.mxu0 0.0
      %638 = vmatprep.subr.mxu0 0.0
      %639 = vmatpush1.msra.mxu0 0.0
      %640 = vmatprep.subr.mxu0 0.0
      %641 = vmatpush1.msra.mxu0 0.0
      %642 = vmatprep.subr.mxu0 0.0
      %643 = vmatpush1.msra.mxu0 0.0
      %644 = vmatprep.subr.mxu0 0.0
      %645 = vmatpush1.msra.mxu0 0.0
      %646 = vmatprep.subr.mxu0 0.0
      %647 = vmatpush1.msra.mxu0 0.0
      %648 = vmatprep.subr.mxu0 0.0
      %649 = vmatpush1.msra.mxu0 0.0
      %650 = vmatprep.subr.mxu0 0.0
      %651 = vmatpush1.msra.mxu0 0.0
      %652 = vmatprep.subr.mxu0 0.0
      %653 = vmatpush1.msra.mxu0 0.0
      %654 = vmatprep.subr.mxu0 0.0
      %655 = vmatpush1.msra.mxu0 0.0
      %656 = vmatprep.subr.mxu0 0.0
      %657 = vmatpush1.msra.mxu0 0.0
      %658 = vmatprep.subr.mxu0 0.0
      %659 = vmatpush1.msra.mxu0 0.0
      %660 = vmatprep.subr.mxu0 0.0
      %661 = vmatpush1.msra.mxu0 0.0
      %662 = vmatprep.subr.mxu0 0.0
      %663 = vmatpush1.msra.mxu0 0.0
      %664 = vmatprep.subr.mxu0 0.0
      %665 = vmatpush1.msra.mxu0 0.0
      %666 = vmatprep.subr.mxu0 0.0
      %667 = vmatpush1.msra.mxu0 0.0
      %668 = vmatprep.subr.mxu0 0.0
      %669 = vmatpush1.msra.mxu0 0.0
      %670 = vmatprep.subr.mxu0 0.0
      %671 = vmatpush1.msra.mxu0 0.0
      %672 = vmatprep.subr.mxu0 0.0
      %673 = vmatpush1.msra.mxu0 0.0
      %674 = vmatprep.mubr.f32.mxu0 0.0
      %675 = vmatmul.mubr.f32.gmra.mrb[0].mxu0 %v608
      %v676 = vpop.f32.mrb[0].mxu0
      %v677 = vadd.f32 %v605, %v676
      %v678 = vpop.f32.mrb[0].mxu0
      %679 = vdwg.mxu0
      %680 = vst.msk [vmem:[%s498] sm:$0xff] %vm520, %v677
      %v681 = vld [vmem:[%s7] sm:$0xff]
      %v682 = vld [vmem:[%s7 + $0x8] sm:$0xff]
      %v683 = vld [vmem:[%s7 + $0x10] sm:$0xff]
      %v684 = vld [vmem:[%s7 + $0x18] sm:$0xff]
      %v685 = vld [vmem:[%s8] sm:$0x1]
      %v687 = vlaneseq
      %v688 = vshrl.u32 %v687, 7
      %v689 = vsub.s32 0, %v688
      %v690 = vrot.slane %v685, %v689
      %v693 = vsel %vm520, %v508, 0
      %695 = vmatprep.subr.mxu0 0.0
      %696 = vmatpush1.msra.mxu0 %v681
      %697 = vmatprep.subr.mxu0 0.0
      %698 = vmatpush1.msra.mxu0 %v682
      %699 = vmatprep.subr.mxu0 0.0
      %700 = vmatpush1.msra.mxu0 %v683
      %701 = vmatprep.subr.mxu0 0.0
      %702 = vmatpush1.msra.mxu0 %v684
      %703 = vmatprep.subr.mxu0 0.0
      %704 = vmatpush1.msra.mxu0 0.0
      %705 = vmatprep.subr.mxu0 0.0
      %706 = vmatpush1.msra.mxu0 0.0
      %707 = vmatprep.subr.mxu0 0.0
      %708 = vmatpush1.msra.mxu0 0.0
      %709 = vmatprep.subr.mxu0 0.0
      %710 = vmatpush1.msra.mxu0 0.0
      %711 = vmatprep.subr.mxu0 0.0
      %712 = vmatpush1.msra.mxu0 0.0
      %713 = vmatprep.subr.mxu0 0.0
      %714 = vmatpush1.msra.mxu0 0.0
      %715 = vmatprep.subr.mxu0 0.0
      %716 = vmatpush1.msra.mxu0 0.0
      %717 = vmatprep.subr.mxu0 0.0
      %718 = vmatpush1.msra.mxu0 0.0
      %719 = vmatprep.subr.mxu0 0.0
      %720 = vmatpush1.msra.mxu0 0.0
      %721 = vmatprep.subr.mxu0 0.0
      %722 = vmatpush1.msra.mxu0 0.0
      %723 = vmatprep.subr.mxu0 0.0
      %724 = vmatpush1.msra.mxu0 0.0
      %725 = vmatprep.subr.mxu0 0.0
      %726 = vmatpush1.msra.mxu0 0.0
      %727 = vmatprep.subr.mxu0 0.0
      %728 = vmatpush1.msra.mxu0 0.0
      %729 = vmatprep.subr.mxu0 0.0
      %730 = vmatpush1.msra.mxu0 0.0
      %731 = vmatprep.subr.mxu0 0.0
      %732 = vmatpush1.msra.mxu0 0.0
      %733 = vmatprep.subr.mxu0 0.0
      %734 = vmatpush1.msra.mxu0 0.0
      %735 = vmatprep.subr.mxu0 0.0
      %736 = vmatpush1.msra.mxu0 0.0
      %737 = vmatprep.subr.mxu0 0.0
      %738 = vmatpush1.msra.mxu0 0.0
      %739 = vmatprep.subr.mxu0 0.0
      %740 = vmatpush1.msra.mxu0 0.0
      %741 = vmatprep.subr.mxu0 0.0
      %742 = vmatpush1.msra.mxu0 0.0
      %743 = vmatprep.subr.mxu0 0.0
      %744 = vmatpush1.msra.mxu0 0.0
      %745 = vmatprep.subr.mxu0 0.0
      %746 = vmatpush1.msra.mxu0 0.0
      %747 = vmatprep.subr.mxu0 0.0
      %748 = vmatpush1.msra.mxu0 0.0
      %749 = vmatprep.subr.mxu0 0.0
      %750 = vmatpush1.msra.mxu0 0.0
      %751 = vmatprep.subr.mxu0 0.0
      %752 = vmatpush1.msra.mxu0 0.0
      %753 = vmatprep.subr.mxu0 0.0
      %754 = vmatpush1.msra.mxu0 0.0
      %755 = vmatprep.subr.mxu0 0.0
      %756 = vmatpush1.msra.mxu0 0.0
      %757 = vmatprep.subr.mxu0 0.0
      %758 = vmatpush1.msra.mxu0 0.0
      %759 = vmatprep.mubr.f32.mxu0 0.0
      %760 = vmatmul.mubr.f32.gmra.mrb[0].mxu0 %v693
      %v761 = vpop.f32.mrb[0].mxu0
      %v762 = vadd.f32 %v690, %v761
      %v763 = vpop.f32.mrb[0].mxu0
      %764 = vdwg.mxu0
      %765 = vst.msk [vmem:[%s505] sm:$0xff] %vm520, %v762
      %p766 = scmp.lt.s32.totalorder %s27, 1
      %s767 = scalar_select %p766, %s27, 1
      %p768 = scmp.lt.s32.totalorder %s28, 0
      %s769 = scalar_select %p768, %s28, 0
      %s770 = sadd.s32 %s769, %s767
      %s771 = smul.addr %s770, 8
      %s772 = scalar_lea.vmem %s9, %s771
      %p773 = scmp.lt.s32.totalorder %s27, 1
      %s774 = scalar_select %p773, %s27, 1
      %p775 = scmp.lt.s32.totalorder %s28, 0
      %s776 = scalar_select %p775, %s28, 0
      %s777 = sadd.s32 %s776, %s774
      %s778 = smul.addr %s777, 8
      %s779 = scalar_lea.vmem %s10, %s778
      %p780 = scmp.lt.s32.totalorder %s27, 1
      %s781 = scalar_select %p780, %s27, 1
      %p782 = scmp.lt.s32.totalorder %s28, 0
      %s783 = scalar_select %p782, %s28, 0
      %s784 = sadd.s32 %s783, %s781
      %s785 = smul.addr %s784, 8
      %s786 = scalar_lea.vmem %s11, %s785
      // Predicated region
      $region57: #{multi_head_attention.2} parent=55 // pred_check
        %p787 = pneg %p265
      $region58: #{multi_head_attention.2} parent=55 // pred_check_branch
        %789 = sbr.rel (%p787) target = $region60
      $region59: #{multi_head_attention.2} parent=55 // pred_region
        _
      $region60: #{multi_head_attention.2} parent=55 // pred_fallthru
        _
      // Predicated region
      $region61: #{multi_head_attention.2} parent=55 // pred_check
        %p790 = pneg %p293
      $region62: #{multi_head_attention.2} parent=55 // pred_check_branch
        %792 = sbr.rel (%p790) target = $region64
      $region63: #{multi_head_attention.2} parent=55 // pred_region
        _
      $region64: #{multi_head_attention.2} parent=55 // pred_fallthru
        _
      // Predicated region
      $region65: #{multi_head_attention.2} parent=55 // pred_check
        %p793 = pneg %p321
      $region66: #{multi_head_attention.2} parent=55 // pred_check_branch
        %795 = sbr.rel (%p793) target = $region68
      $region67: #{multi_head_attention.2} parent=55 // pred_region
        _
      $region68: #{multi_head_attention.2} parent=55 // pred_fallthru
        _
    $region56: #{multi_head_attention.2} parent=5 // pred_fallthru
      _
    %p796 = scmp.le.s32.totalorder 2, %s18
    // Predicated region
    $region69: #{multi_head_attention.2} parent=5 // pred_check
      %p797 = pneg %p796
    $region70: #{multi_head_attention.2} parent=5 // pred_check_branch
      %799 = sbr.rel (%p797) target = $region72
    $region71: #{multi_head_attention.2} parent=5 // pred_region
      %s800 = ssub.s32 %s18, 2
      // Predicated region
      $region73: #{multi_head_attention.2} parent=71 // pred_check
        %p801 = pneg %p271
      $region74: #{multi_head_attention.2} parent=71 // pred_check_branch
        %803 = sbr.rel (%p801) target = $region76
      $region75: #{multi_head_attention.2} parent=71 // pred_region
        %p804 = scmp.lt.s32.totalorder %s29, 1
        %s805 = scalar_select %p804, %s29, 1
        %p806 = scmp.lt.s32.totalorder %s30, 0
        %s807 = scalar_select %p806, %s30, 0
        %s808 = sadd.s32 %s807, %s805
        %s809 = smul.addr %s808, 8
        %s810 = scalar_lea.vmem %s9, %s809
      $region76: #{multi_head_attention.2} parent=71 // pred_fallthru
        _
      // Predicated region
      $region77: #{multi_head_attention.2} parent=71 // pred_check
        %p811 = pneg %p299
      $region78: #{multi_head_attention.2} parent=71 // pred_check_branch
        %813 = sbr.rel (%p811) target = $region80
      $region79: #{multi_head_attention.2} parent=71 // pred_region
        %p814 = scmp.lt.s32.totalorder %s29, 1
        %s815 = scalar_select %p814, %s29, 1
        %p816 = scmp.lt.s32.totalorder %s30, 0
        %s817 = scalar_select %p816, %s30, 0
        %s818 = sadd.s32 %s817, %s815
        %s819 = smul.addr %s818, 8
        %s820 = scalar_lea.vmem %s10, %s819
      $region80: #{multi_head_attention.2} parent=71 // pred_fallthru
        _
      // Predicated region
      $region81: #{multi_head_attention.2} parent=71 // pred_check
        %p821 = pneg %p327
      $region82: #{multi_head_attention.2} parent=71 // pred_check_branch
        %823 = sbr.rel (%p821) target = $region84
      $region83: #{multi_head_attention.2} parent=71 // pred_region
        %p824 = scmp.lt.s32.totalorder %s29, 1
        %s825 = scalar_select %p824, %s29, 1
        %p826 = scmp.lt.s32.totalorder %s30, 0
        %s827 = scalar_select %p826, %s30, 0
        %s828 = sadd.s32 %s827, %s825
        %s829 = smul.addr %s828, 8
        %s830 = scalar_lea.vmem %s11, %s829
      $region84: #{multi_head_attention.2} parent=71 // pred_fallthru
        _
    $region72: #{multi_head_attention.2} parent=5 // pred_fallthru
      _
  $region6: #{multi_head_attention.2} parent=0 // loop_footer
    %s22 = sadd.s32 1, %s18
  $region7: #{multi_head_attention.2} parent=0 // loop_footer_branch
    %17 = sbr.rel target = $region3
  $region8: #{multi_head_attention.2} parent=0 // loop_exit
    _

// kernel: multi_head_attention.3
$region0: #{multi_head_attention.3}
  #allocation0 [shape = 'u32[]', space=smem, size = 0x4, offset = 0x4, fixed_abs, tag = 'smem constant byte address 0x4 - core index']
  #allocation1 [shape = 'u32[144,128]{1,0:T(1,128)}', space=vmem, size = 0x12000, scoped, tag = 'internal scratch']
  #allocation2 [shape = 'f32[4,8,1]{2,1,0:T(8,128)}', space=vmem, size = 0x4000, scoped, tag = 'scratch operand']
  #allocation3 [shape = 'f32[4,8,1]{2,1,0:T(8,128)}', space=vmem, size = 0x4000, scoped, tag = 'scratch operand']
  #allocation4 [shape = 'f32[4,8,8]{2,1,0:T(8,128)}', space=vmem, size = 0x4000, scoped, tag = 'scratch operand']
  #allocation5 [shape = 'f32[8,32]{1,0:T(8,128)}', space=vmem, size = 0x1000, scoped, tag = 'scratch operand']
  %s0 = inlined_call_operand.vmem [shape: f32[2,8,32], index: 0, kind: input, shape index: {}]
  %s1 = inlined_call_operand.vmem [shape: f32[2,8,32], index: 1, kind: input, shape index: {}]
  %s2 = inlined_call_operand.vmem [shape: f32[2,8,32], index: 2, kind: input, shape index: {}]
  %s3 = inlined_call_operand.vmem [shape: s8[2,8,8], index: 3, kind: input, shape index: {}]
  %s4 = inlined_call_operand.vmem [shape: f32[32,32], index: 4, kind: input, shape index: {}]
  %s5 = inlined_call_operand.vmem [shape: f32[1,32], index: 5, kind: input, shape index: {}]
  %s6 = inlined_call_operand.hbm [shape: f32[2,8,32], index: 6, kind: output, shape index: {}]
  %s7 = sld [smem:[#allocation0]]
  $region65: #{multi_head_attention.3} parent=0
    _
  %s9 = ssub.s32 1, %s7
  %s10 = scalar_select 0, %s9, %s7
  $region1: #{multi_head_attention.3} parent=0
    #allocation6 [shape = 'u8[8192]{0}', space=vmem, size = 0x2000, scoped, tag = 'output window, operand 0']
    #allocation7 [shape = 's32[2]{0}', space=sflag, size = 0x8, scoped, tag = 'scoped memory for multi_head_attention.3']
    %11 = vsyncpa [#allocation7], 0
    %s12 = scalar_lea.sflag [#allocation7], 1
    %13 = vsyncpa %s12, 0
    loop: start=0, step=1, limit=4
    $region2: #{multi_head_attention.3} parent=1 // loop_pre_header
      _
    $region3: #{multi_head_attention.3} parent=1 // loop_header
      %s15 = sphi 0, %s19
      %p16 = scmp.ge.s32.totalorder %s15, 4
      %s22 = sphi 0, %s41
      %s23 = sphi 0, %s37
      %s24 = sphi 0, %s33
      %s25 = sphi 0, %s22
      %s26 = sphi 0, %s23
      %s27 = sphi 0, %s24
      %s28 = sphi 0, %s25
      %s29 = sphi 0, %s26
      %s30 = sphi 0, %s27
      %s46 = sphi 0, %s48
      %s49 = sphi 0, %s46
      %s50 = sphi 0, %s49
      %s66 = sphi 0, %s50
      %s74 = sphi 0, %s76
      %s77 = sphi 0, %s74
      %s78 = sphi 0, %s77
      %s94 = sphi 0, %s78
      %s102 = sphi 0, %s104
      %s105 = sphi 0, %s102
      %s106 = sphi 0, %s105
      %s122 = sphi 0, %s106
      %s132 = sphi 0, %s134
      %s135 = sphi 0, %s132
      %s136 = sphi 0, %s135
      %s152 = sphi 0, %s136
      %s156 = sphi 0, %s156
      %s158 = sphi 0, %s156
      %s159 = sphi 0, %s158
      %s173 = sphi 0, %s159
      %s177 = sphi 0, %s177
      %s179 = sphi 0, %s177
      %s180 = sphi 0, %s179
      %s194 = sphi 0, %s180
      %s202 = sphi 0, %s204
      %s205 = sphi 0, %s202
      %s206 = sphi 0, %s205
      %s222 = sphi 0, %s206
    $region4: #{multi_head_attention.3} parent=1 // loop_header_branch
      %18 = sbr.rel (%p16) target = $region8
    $region5: #{multi_head_attention.3} parent=1 // loop_body
      %s20 = ssub.s32 %s15, 1
      %s21 = ssub.s32 %s15, 2
      %s31 = sadd.s32 1, %s24
      %p32 = scmp.ge.s32.totalorder %s31, 1
      %s33 = scalar_select %p32, 0, %s31
      %s34 = sadd.s32 1, %s23
      %s35 = scalar_select %p32, %s34, %s23
      %p36 = scmp.ge.s32.totalorder %s35, 1
      %s37 = scalar_select %p36, 0, %s35
      %s38 = sadd.s32 1, %s22
      %s39 = scalar_select %p36, %s38, %s22
      %p40 = scmp.ge.s32.totalorder %s39, 2
      %s41 = scalar_select %p40, 0, %s39
      %s42 = ssub.s32 %s22, %s41
      %s43 = ssub.s32 %s23, %s37
      %s44 = sor.u32 %s42, %s43
      %p45 = scmp.eq.s32.totalorder %s44, 0
      %s47 = sadd.s32 %s46, 1
      %s48 = scalar_select %p45, %s46, %s47
      %p51 = pneg %p45
      %p52 = scmp.eq.s32.totalorder %s15, 1
      %p53 = por %p51, %p52
      %p54 = scmp.ne.s32.totalorder %s46, %s49
      %p55 = scmp.eq.s32.totalorder %s15, 0
      %p56 = por %p54, %p55
      %p57 = scmp.ne.s32.totalorder %s46, %s49
      %p58 = scmp.eq.s32.totalorder %s20, 1
      %p59 = por %p57, %p58
      %p60 = scmp.ne.s32.totalorder %s49, %s50
      %p61 = scmp.eq.s32.totalorder %s20, 0
      %p62 = por %p60, %p61
      %p63 = scmp.ne.s32.totalorder %s49, %s50
      %p64 = scmp.eq.s32.totalorder %s21, 1
      %p65 = por %p63, %p64
      %p67 = scmp.ne.s32.totalorder %s50, %s66
      %p68 = scmp.eq.s32.totalorder %s21, 0
      %p69 = por %p67, %p68
      %s70 = ssub.s32 %s22, %s41
      %s71 = ssub.s32 %s24, %s33
      %s72 = sor.u32 %s70, %s71
      %p73 = scmp.eq.s32.totalorder %s72, 0
      %s75 = sadd.s32 %s74, 1
      %s76 = scalar_select %p73, %s74, %s75
      %p79 = pneg %p73
      %p80 = scmp.eq.s32.totalorder %s15, 1
      %p81 = por %p79, %p80
      %p82 = scmp.ne.s32.totalorder %s74, %s77
      %p83 = scmp.eq.s32.totalorder %s15, 0
      %p84 = por %p82, %p83
      %p85 = scmp.ne.s32.totalorder %s74, %s77
      %p86 = scmp.eq.s32.totalorder %s20, 1
      %p87 = por %p85, %p86
      %p88 = scmp.ne.s32.totalorder %s77, %s78
      %p89 = scmp.eq.s32.totalorder %s20, 0
      %p90 = por %p88, %p89
      %p91 = scmp.ne.s32.totalorder %s77, %s78
      %p92 = scmp.eq.s32.totalorder %s21, 1
      %p93 = por %p91, %p92
      %p95 = scmp.ne.s32.totalorder %s78, %s94
      %p96 = scmp.eq.s32.totalorder %s21, 0
      %p97 = por %p95, %p96
      %s98 = ssub.s32 %s22, %s41
      %s99 = ssub.s32 %s24, %s33
      %s100 = sor.u32 %s98, %s99
      %p101 = scmp.eq.s32.totalorder %s100, 0
      %s103 = sadd.s32 %s102, 1
      %s104 = scalar_select %p101, %s102, %s103
      %p107 = pneg %p101
      %p108 = scmp.eq.s32.totalorder %s15, 1
      %p109 = por %p107, %p108
      %p110 = scmp.ne.s32.totalorder %s102, %s105
      %p111 = scmp.eq.s32.totalorder %s15, 0
      %p112 = por %p110, %p111
      %p113 = scmp.ne.s32.totalorder %s102, %s105
      %p114 = scmp.eq.s32.totalorder %s20, 1
      %p115 = por %p113, %p114
      %p116 = scmp.ne.s32.totalorder %s105, %s106
      %p117 = scmp.eq.s32.totalorder %s20, 0
      %p118 = por %p116, %p117
      %p119 = scmp.ne.s32.totalorder %s105, %s106
      %p120 = scmp.eq.s32.totalorder %s21, 1
      %p121 = por %p119, %p120
      %p123 = scmp.ne.s32.totalorder %s106, %s122
      %p124 = scmp.eq.s32.totalorder %s21, 0
      %p125 = por %p123, %p124
      %s126 = ssub.s32 %s22, %s41
      %s127 = ssub.s32 %s23, %s37
      %s128 = sor.u32 %s126, %s127
      %s129 = ssub.s32 %s24, %s33
      %s130 = sor.u32 %s128, %s129
      %p131 = scmp.eq.s32.totalorder %s130, 0
      %s133 = sadd.s32 %s132, 1
      %s134 = scalar_select %p131, %s132, %s133
      %p137 = pneg %p131
      %p138 = scmp.eq.s32.totalorder %s15, 1
      %p139 = por %p137, %p138
      %p140 = scmp.ne.s32.totalorder %s132, %s135
      %p141 = scmp.eq.s32.totalorder %s15, 0
      %p142 = por %p140, %p141
      %p143 = scmp.ne.s32.totalorder %s132, %s135
      %p144 = scmp.eq.s32.totalorder %s20, 1
      %p145 = por %p143, %p144
      %p146 = scmp.ne.s32.totalorder %s135, %s136
      %p147 = scmp.eq.s32.totalorder %s20, 0
      %p148 = por %p146, %p147
      %p149 = scmp.ne.s32.totalorder %s135, %s136
      %p150 = scmp.eq.s32.totalorder %s21, 1
      %p151 = por %p149, %p150
      %p153 = scmp.ne.s32.totalorder %s136, %s152
      %p154 = scmp.eq.s32.totalorder %s21, 0
      %p155 = por %p153, %p154
      %s157 = sadd.s32 %s156, 1
      %p160 = scmp.eq.s32.totalorder %s15, 1
      %p161 = scmp.ne.s32.totalorder %s156, %s158
      %p162 = scmp.eq.s32.totalorder %s15, 0
      %p163 = por %p161, %p162
      %p164 = scmp.ne.s32.totalorder %s156, %s158
      %p165 = scmp.eq.s32.totalorder %s20, 1
      %p166 = por %p164, %p165
      %p167 = scmp.ne.s32.totalorder %s158, %s159
      %p168 = scmp.eq.s32.totalorder %s20, 0
      %p169 = por %p167, %p168
      %p170 = scmp.ne.s32.totalorder %s158, %s159
      %p171 = scmp.eq.s32.totalorder %s21, 1
      %p172 = por %p170, %p171
      %p174 = scmp.ne.s32.totalorder %s159, %s173
      %p175 = scmp.eq.s32.totalorder %s21, 0
      %p176 = por %p174, %p175
      %s178 = sadd.s32 %s177, 1
      %p181 = scmp.eq.s32.totalorder %s15, 1
      %p182 = scmp.ne.s32.totalorder %s177, %s179
      %p183 = scmp.eq.s32.totalorder %s15, 0
      %p184 = por %p182, %p183
      %p185 = scmp.ne.s32.totalorder %s177, %s179
      %p186 = scmp.eq.s32.totalorder %s20, 1
      %p187 = por %p185, %p186
      %p188 = scmp.ne.s32.totalorder %s179, %s180
      %p189 = scmp.eq.s32.totalorder %s20, 0
      %p190 = por %p188, %p189
      %p191 = scmp.ne.s32.totalorder %s179, %s180
      %p192 = scmp.eq.s32.totalorder %s21, 1
      %p193 = por %p191, %p192
      %p195 = scmp.ne.s32.totalorder %s180, %s194
      %p196 = scmp.eq.s32.totalorder %s21, 0
      %p197 = por %p195, %p196
      %s198 = ssub.s32 %s22, %s41
      %s199 = ssub.s32 %s23, %s37
      %s200 = sor.u32 %s198, %s199
      %p201 = scmp.eq.s32.totalorder %s200, 0
      %s203 = sadd.s32 %s202, 1
      %s204 = scalar_select %p201, %s202, %s203
      %p207 = pneg %p201
      %p208 = scmp.eq.s32.totalorder %s15, 1
      %p209 = por %p207, %p208
      %p210 = scmp.ne.s32.totalorder %s202, %s205
      %p211 = scmp.eq.s32.totalorder %s15, 0
      %p212 = por %p210, %p211
      %p213 = scmp.ne.s32.totalorder %s202, %s205
      %p214 = scmp.eq.s32.totalorder %s20, 1
      %p215 = por %p213, %p214
      %p216 = scmp.ne.s32.totalorder %s205, %s206
      %p217 = scmp.eq.s32.totalorder %s20, 0
      %p218 = por %p216, %p217
      %p219 = scmp.ne.s32.totalorder %s205, %s206
      %p220 = scmp.eq.s32.totalorder %s21, 1
      %p221 = por %p219, %p220
      %p223 = scmp.ne.s32.totalorder %s206, %s222
      %p224 = scmp.eq.s32.totalorder %s21, 0
      %p225 = por %p223, %p224
      %p226 = scmp.le.s32.totalorder 1, %s15
      %p227 = scmp.lt.s32.totalorder %s15, 3
      %p228 = pnand %p226, %p227
      %p229 = pneg %p228
      // Predicated region
      $region9: #{multi_head_attention.3} parent=5 // pred_check
        _
      $region10: #{multi_head_attention.3} parent=5 // pred_check_branch
        %231 = sbr.rel (%p228) target = $region12
      $region11: #{multi_head_attention.3} parent=5 // pred_region
        %s232 = ssub.s32 %s15, 1
        // Predicated region
        $region13: #{multi_head_attention.3} parent=11 // pred_check
          %p233 = pneg %p169
        $region14: #{multi_head_attention.3} parent=11 // pred_check_branch
          %235 = sbr.rel (%p233) target = $region16
        $region15: #{multi_head_attention.3} parent=11 // pred_region
          _
        $region16: #{multi_head_attention.3} parent=11 // pred_fallthru
          _
        // Predicated region
        $region17: #{multi_head_attention.3} parent=11 // pred_check
          %p236 = pneg %p190
        $region18: #{multi_head_attention.3} parent=11 // pred_check_branch
          %238 = sbr.rel (%p236) target = $region20
        $region19: #{multi_head_attention.3} parent=11 // pred_region
          _
        $region20: #{multi_head_attention.3} parent=11 // pred_fallthru
          _
      $region12: #{multi_head_attention.3} parent=5 // pred_fallthru
        _
      %p239 = scmp.lt.s32.totalorder %s15, 2
      // Predicated region
      $region21: #{multi_head_attention.3} parent=5 // pred_check
        %p240 = pneg %p239
      $region22: #{multi_head_attention.3} parent=5 // pred_check_branch
        %242 = sbr.rel (%p240) target = $region24
      $region23: #{multi_head_attention.3} parent=5 // pred_region
        // Predicated region
        $region25: #{multi_head_attention.3} parent=23 // pred_check
          %p243 = pneg %p56
        $region26: #{multi_head_attention.3} parent=23 // pred_check_branch
          %245 = sbr.rel (%p243) target = $region28
        $region27: #{multi_head_attention.3} parent=23 // pred_region
          %p246 = scmp.lt.s32.totalorder %s22, 1
          %s247 = scalar_select %p246, %s22, 1
          %p248 = scmp.lt.s32.totalorder %s23, 0
          %s249 = scalar_select %p248, %s23, 0
          %s250 = sadd.s32 %s249, %s247
          %s251 = smul.addr %s250, 8
          %s252 = scalar_lea.vmem %s0, %s251
        $region28: #{multi_head_attention.3} parent=23 // pred_fallthru
          _
        // Predicated region
        $region29: #{multi_head_attention.3} parent=23 // pred_check
          %p253 = pneg %p84
        $region30: #{multi_head_attention.3} parent=23 // pred_check_branch
          %255 = sbr.rel (%p253) target = $region32
        $region31: #{multi_head_attention.3} parent=23 // pred_region
          %p256 = scmp.lt.s32.totalorder %s22, 1
          %s257 = scalar_select %p256, %s22, 1
          %p258 = scmp.lt.s32.totalorder %s24, 0
          %s259 = scalar_select %p258, %s24, 0
          %s260 = sadd.s32 %s259, %s257
          %s261 = smul.addr %s260, 8
          %s262 = scalar_lea.vmem %s1, %s261
        $region32: #{multi_head_attention.3} parent=23 // pred_fallthru
          _
        // Predicated region
        $region33: #{multi_head_attention.3} parent=23 // pred_check
          %p263 = pneg %p112
        $region34: #{multi_head_attention.3} parent=23 // pred_check_branch
          %265 = sbr.rel (%p263) target = $region36
        $region35: #{multi_head_attention.3} parent=23 // pred_region
          %p266 = scmp.lt.s32.totalorder %s22, 1
          %s267 = scalar_select %p266, %s22, 1
          %p268 = scmp.lt.s32.totalorder %s24, 0
          %s269 = scalar_select %p268, %s24, 0
          %s270 = sadd.s32 %s269, %s267
          %s271 = smul.addr %s270, 8
          %s272 = scalar_lea.vmem %s2, %s271
        $region36: #{multi_head_attention.3} parent=23 // pred_fallthru
          _
        // Predicated region
        $region37: #{multi_head_attention.3} parent=23 // pred_check
          %p273 = pneg %p142
        $region38: #{multi_head_attention.3} parent=23 // pred_check_branch
          %275 = sbr.rel (%p273) target = $region40
        $region39: #{multi_head_attention.3} parent=23 // pred_region
          %p276 = scmp.lt.s32.totalorder %s22, 1
          %s277 = scalar_select %p276, %s22, 1
          %p278 = scmp.lt.s32.totalorder %s23, 0
          %s279 = scalar_select %p278, %s23, 0
          %p280 = scmp.lt.s32.totalorder %s24, 0
          %s281 = scalar_select %p280, %s24, 0
          %s282 = sadd.s32 %s281, %s279
          %s283 = sadd.s32 %s282, %s277
          %s284 = smul.addr %s283, 2
          %s285 = scalar_lea.vmem %s3, %s284
        $region40: #{multi_head_attention.3} parent=23 // pred_fallthru
          _
      $region24: #{multi_head_attention.3} parent=5 // pred_fallthru
        _
      %p286 = scmp.le.s32.totalorder 1, %s15
      %p287 = scmp.lt.s32.totalorder %s15, 3
      %p288 = pnand %p286, %p287
      %p289 = pneg %p288
      // Predicated region
      $region41: #{multi_head_attention.3} parent=5 // pred_check
        _
      $region42: #{multi_head_attention.3} parent=5 // pred_check_branch
        %291 = sbr.rel (%p288) target = $region44
      $region43: #{multi_head_attention.3} parent=5 // pred_region
        %s292 = ssub.s32 %s15, 1
        %p293 = scmp.lt.s32.totalorder %s25, 1
        %s294 = scalar_select %p293, %s25, 1
        %p295 = scmp.lt.s32.totalorder %s26, 0
        %s296 = scalar_select %p295, %s26, 0
        %s297 = sadd.s32 %s296, %s294
        %s298 = smul.addr %s297, 8
        %s299 = scalar_lea.vmem %s0, %s298
        %p300 = pneg %p62
        %p301 = pneg %p59
        %p302 = scmp.lt.s32.totalorder %s25, 1
        %s303 = scalar_select %p302, %s25, 1
        %p304 = scmp.lt.s32.totalorder %s27, 0
        %s305 = scalar_select %p304, %s27, 0
        %s306 = sadd.s32 %s305, %s303
        %s307 = smul.addr %s306, 8
        %s308 = scalar_lea.vmem %s1, %s307
        %p309 = pneg %p90
        %p310 = pneg %p87
        %p311 = scmp.lt.s32.totalorder %s25, 1
        %s312 = scalar_select %p311, %s25, 1
        %p313 = scmp.lt.s32.totalorder %s27, 0
        %s314 = scalar_select %p313, %s27, 0
        %s315 = sadd.s32 %s314, %s312
        %s316 = smul.addr %s315, 8
        %s317 = scalar_lea.vmem %s2, %s316
        %p318 = pneg %p118
        %p319 = pneg %p115
        %p320 = scmp.lt.s32.totalorder %s25, 1
        %s321 = scalar_select %p320, %s25, 1
        %p322 = scmp.lt.s32.totalorder %s26, 0
        %s323 = scalar_select %p322, %s26, 0
        %p324 = scmp.lt.s32.totalorder %s27, 0
        %s325 = scalar_select %p324, %s27, 0
        %s326 = sadd.s32 %s325, %s323
        %s327 = sadd.s32 %s326, %s321
        %s328 = smul.addr %s327, 2
        %s329 = scalar_lea.vmem %s3, %s328
        %p330 = pneg %p148
        %p331 = pneg %p145
        %p332 = pneg %p169
        %p333 = pneg %p166
        %p334 = pneg %p190
        %p335 = pneg %p187
        %p336 = pneg %p218
        %p337 = pneg %p215
        %s338 = sand.u32 %s205, 1
        %s339 = scalar_lea.sflag [#allocation7], %s338
        %s340 = sand.u32 %s205, 1
        %s341 = smul.addr %s340, 8
        %s342 = scalar_lea.vmem [#allocation6], %s341
        %p343 = scmp.lt.s32.totalorder %s25, 1
        %s344 = scalar_select %p343, %s25, 1
        %p345 = scmp.lt.s32.totalorder %s26, 0
        %s346 = scalar_select %p345, %s26, 0
        %s347 = sadd.s32 %s346, %s344
        %s348 = smul.addr %s347, 8
        %s349 = scalar_lea.vmem %s0, %s348
        %p350 = scmp.lt.s32.totalorder %s25, 1
        %s351 = scalar_select %p350, %s25, 1
        %p352 = scmp.lt.s32.totalorder %s27, 0
        %s353 = scalar_select %p352, %s27, 0
        %s354 = sadd.s32 %s353, %s351
        %s355 = smul.addr %s354, 8
        %s356 = scalar_lea.vmem %s1, %s355
        %p357 = scmp.lt.s32.totalorder %s25, 1
        %s358 = scalar_select %p357, %s25, 1
        %p359 = scmp.lt.s32.totalorder %s27, 0
        %s360 = scalar_select %p359, %s27, 0
        %s361 = sadd.s32 %s360, %s358
        %s362 = smul.addr %s361, 8
        %s363 = scalar_lea.vmem %s2, %s362
        %p364 = scmp.lt.s32.totalorder %s25, 1
        %s365 = scalar_select %p364, %s25, 1
        %p366 = scmp.lt.s32.totalorder %s26, 0
        %s367 = scalar_select %p366, %s26, 0
        %p368 = scmp.lt.s32.totalorder %s27, 0
        %s369 = scalar_select %p368, %s27, 0
        %s370 = sadd.s32 %s369, %s367
        %s371 = sadd.s32 %s370, %s365
        %s372 = smul.addr %s371, 2
        %s373 = scalar_lea.vmem %s3, %s372
        %p376 = scmp.eq.s32.totalorder %s27, 0
        // Predicated region
        $region45: #{multi_head_attention.3} parent=43 // pred_check
          %p377 = pneg %p376
        $region46: #{multi_head_attention.3} parent=43 // pred_check_branch
          %379 = sbr.rel (%p377) target = $region48
        $region47: #{multi_head_attention.3} parent=43 // pred_region
          %vm380 = vcmask 7168
          %381 = vst.msk [vmem:[#allocation2] sm:$0xff] %vm380, -inf
          %382 = vst.msk [vmem:[#allocation2 + $0x8] sm:$0xff] %vm380, -inf
          %383 = vst.msk [vmem:[#allocation2 + $0x10] sm:$0xff] %vm380, -inf
          %384 = vst.msk [vmem:[#allocation2 + $0x18] sm:$0xff] %vm380, -inf
          %385 = vst.msk [vmem:[#allocation3] sm:$0xff] %vm380, 0.0
          %386 = vst.msk [vmem:[#allocation3 + $0x8] sm:$0xff] %vm380, 0.0
          %387 = vst.msk [vmem:[#allocation3 + $0x10] sm:$0xff] %vm380, 0.0
          %388 = vst.msk [vmem:[#allocation3 + $0x18] sm:$0xff] %vm380, 0.0
          %vm389 = vcmask 64512
          %390 = vst.msk [vmem:[#allocation4] sm:$0xff] %vm389, 0.0
          %391 = vst.msk [vmem:[#allocation4 + $0x8] sm:$0xff] %vm389, 0.0
          %392 = vst.msk [vmem:[#allocation4 + $0x10] sm:$0xff] %vm389, 0.0
          %393 = vst.msk [vmem:[#allocation4 + $0x18] sm:$0xff] %vm389, 0.0
        $region48: #{multi_head_attention.3} parent=43 // pred_fallthru
          _
        %v394 = vld [vmem:[%s349] sm:$0xff]
        %v395 = vld [vmem:[%s356] sm:$0xff]
        %v396 = vld [vmem:[%s363] sm:$0xff]
        %v397 = vld [vmem:[%s373] sm:$0x3]
        %vm398 = vnez %v397
        %vm399 = vcmask 64512
        %v401 = vsel %vm399, %v394, 0
        %v404 = vsel %vm399, %v395, 0
        %406 = vmatprep.subr.mxu0 0.0
        %407 = vmatpush1.xpose.msra.mxu0 %v404
        %408 = vmatprep.subr.mxu0 0.0
        %409 = vmatpush1.xpose.msra.mxu0 0.0
        %410 = vmatprep.subr.mxu0 0.0
        %411 = vmatpush1.xpose.msra.mxu0 0.0
        %412 = vmatprep.subr.mxu0 0.0
        %413 = vmatpush1.xpose.msra.mxu0 0.0
        %414 = vmatprep.subr.mxu0 0.0
        %415 = vmatpush1.xpose.msra.mxu0 0.0
        %416 = vmatprep.subr.mxu0 0.0
        %417 = vmatpush1.xpose.msra.mxu0 0.0
        %418 = vmatprep.subr.mxu0 0.0
        %419 = vmatpush1.xpose.msra.mxu0 0.0
        %420 = vmatprep.subr.mxu0 0.0
        %421 = vmatpush1.xpose.msra.mxu0 0.0
        %422 = vmatprep.subr.mxu0 0.0
        %423 = vmatpush1.xpose.msra.mxu0 0.0
        %424 = vmatprep.subr.mxu0 0.0
        %425 = vmatpush1.xpose.msra.mxu0 0.0
        %426 = vmatprep.subr.mxu0 0.0
        %427 = vmatpush1.xpose.msra.mxu0 0.0
        %428 = vmatprep.subr.mxu0 0.0
        %429 = vmatpush1.xpose.msra.mxu0 0.0
        %430 = vmatprep.subr.mxu0 0.0
        %431 = vmatpush1.xpose.msra.mxu0 0.0
        %432 = vmatprep.subr.mxu0 0.0
        %433 = vmatpush1.xpose.msra.mxu0 0.0
        %434 = vmatprep.subr.mxu0 0.0
        %435 = vmatpush1.xpose.msra.mxu0 0.0
        %436 = vmatprep.subr.mxu0 0.0
        %437 = vmatpush1.xpose.msra.mxu0 0.0
        %438 = vmatprep.subr.mxu0 0.0
        %439 = vmatpush1.xpose.msra.mxu0 0.0
        %440 = vmatprep.subr.mxu0 0.0
        %441 = vmatpush1.xpose.msra.mxu0 0.0
        %442 = vmatprep.subr.mxu0 0.0
        %443 = vmatpush1.xpose.msra.mxu0 0.0
        %444 = vmatprep.subr.mxu0 0.0
        %445 = vmatpush1.xpose.msra.mxu0 0.0
        %446 = vmatprep.subr.mxu0 0.0
        %447 = vmatpush1.xpose.msra.mxu0 0.0
        %448 = vmatprep.subr.mxu0 0.0
        %449 = vmatpush1.xpose.msra.mxu0 0.0
        %450 = vmatprep.subr.mxu0 0.0
        %451 = vmatpush1.xpose.msra.mxu0 0.0
        %452 = vmatprep.subr.mxu0 0.0
        %453 = vmatpush1.xpose.msra.mxu0 0.0
        %454 = vmatprep.subr.mxu0 0.0
        %455 = vmatpush1.xpose.msra.mxu0 0.0
        %456 = vmatprep.subr.mxu0 0.0
        %457 = vmatpush1.xpose.msra.mxu0 0.0
        %458 = vmatprep.subr.mxu0 0.0
        %459 = vmatpush1.xpose.msra.mxu0 0.0
        %460 = vmatprep.subr.mxu0 0.0
        %461 = vmatpush1.xpose.msra.mxu0 0.0
        %462 = vmatprep.subr.mxu0 0.0
        %463 = vmatpush1.xpose.msra.mxu0 0.0
        %464 = vmatprep.subr.mxu0 0.0
        %465 = vmatpush1.xpose.msra.mxu0 0.0
        %466 = vmatprep.subr.mxu0 0.0
        %467 = vmatpush1.xpose.msra.mxu0 0.0
        %468 = vmatprep.subr.mxu0 0.0
        %469 = vmatpush1.xpose.msra.mxu0 0.0
        %470 = vmatprep.mubr.f32.mxu0 0.0
        %471 = vmatmul.mubr.f32.gmra.mrb[0].mxu0 %v401
        %v472 = vpop.f32.mrb[0].mxu0
        %v473 = vadd.f32 0.0, %v472
        %v474 = vpop.f32.mrb[0].mxu0
        %475 = vdwg.mxu0
        %v476 = vsel %vm398, 16843009, 0
        %v477 = vunpack.c.0.s8 %v476
        %vm478 = vcmp.ne.s32.totalorder %v477, 0
        %v479 = vsel %vm478, -1e-06, %v473
        %v480 = vld [vmem:[#allocation2] sm:$0xff]
        %v481 = vsel %vm399, %v479, -inf
        %482 = vmax.xlane.f32.xlu0 %v481
        %v483 = vpop.xlane.xlu0 %482
        %v484 = vmax.f32 %v480, %v483
        %v485 = vsub.f32 %v480, %v484
        %v486 = vmul.f32 %v485, 1.442695
        %v487 = vpow.pop %v486
        %489 = vset.pattern.permute.xlu0 0
        %490 = vperm.xlu0 %489, %v484
        %v491 = vpop.permute.xlu0 %490
        %v493 = vsub.f32 %v479, %v491
        %v494 = vmul.f32 %v493, 1.442695
        %v495 = vpow.pop %v494
        %v496 = vld [vmem:[#allocation3] sm:$0xff]
        %v497 = vmul.f32 %v487, %v496
        %v498 = vsel %vm399, %v495, 0.0
        %499 = vadd.xlane.f32.xlu0 %v498
        %v500 = vpop.xlane.xlu0 %499
        %v501 = vadd.f32 %v497, %v500
        %vm502 = vcmask 7168
        %503 = vst.msk [vmem:[#allocation3] sm:$0xff] %vm502, %v501
        %v504 = vld [vmem:[#allocation4] sm:$0xff]
        %506 = vset.pattern.permute.xlu0 0
        %507 = vperm.xlu0 %506, %v487
        %v508 = vpop.permute.xlu0 %507
        %v510 = vmul.f32 %v508, %v504
        %v512 = vsel %vm399, %v495, 0
        %514 = vmatprep.subr.mxu0 0.0
        %515 = vmatpush1.msra.mxu0 %v396
        %516 = vmatprep.subr.mxu0 0.0
        %517 = vmatpush1.msra.mxu0 0.0
        %518 = vmatprep.subr.mxu0 0.0
        %519 = vmatpush1.msra.mxu0 0.0
        %520 = vmatprep.subr.mxu0 0.0
        %521 = vmatpush1.msra.mxu0 0.0
        %522 = vmatprep.subr.mxu0 0.0
        %523 = vmatpush1.msra.mxu0 0.0
        %524 = vmatprep.subr.mxu0 0.0
        %525 = vmatpush1.msra.mxu0 0.0
        %526 = vmatprep.subr.mxu0 0.0
        %527 = vmatpush1.msra.mxu0 0.0
        %528 = vmatprep.subr.mxu0 0.0
        %529 = vmatpush1.msra.mxu0 0.0
        %530 = vmatprep.subr.mxu0 0.0
        %531 = vmatpush1.msra.mxu0 0.0
        %532 = vmatprep.subr.mxu0 0.0
        %533 = vmatpush1.msra.mxu0 0.0
        %534 = vmatprep.subr.mxu0 0.0
        %535 = vmatpush1.msra.mxu0 0.0
        %536 = vmatprep.subr.mxu0 0.0
        %537 = vmatpush1.msra.mxu0 0.0
        %538 = vmatprep.subr.mxu0 0.0
        %539 = vmatpush1.msra.mxu0 0.0
        %540 = vmatprep.subr.mxu0 0.0
        %541 = vmatpush1.msra.mxu0 0.0
        %542 = vmatprep.subr.mxu0 0.0
        %543 = vmatpush1.msra.mxu0 0.0
        %544 = vmatprep.subr.mxu0 0.0
        %545 = vmatpush1.msra.mxu0 0.0
        %546 = vmatprep.subr.mxu0 0.0
        %547 = vmatpush1.msra.mxu0 0.0
        %548 = vmatprep.subr.mxu0 0.0
        %549 = vmatpush1.msra.mxu0 0.0
        %550 = vmatprep.subr.mxu0 0.0
        %551 = vmatpush1.msra.mxu0 0.0
        %552 = vmatprep.subr.mxu0 0.0
        %553 = vmatpush1.msra.mxu0 0.0
        %554 = vmatprep.subr.mxu0 0.0
        %555 = vmatpush1.msra.mxu0 0.0
        %556 = vmatprep.subr.mxu0 0.0
        %557 = vmatpush1.msra.mxu0 0.0
        %558 = vmatprep.subr.mxu0 0.0
        %559 = vmatpush1.msra.mxu0 0.0
        %560 = vmatprep.subr.mxu0 0.0
        %561 = vmatpush1.msra.mxu0 0.0
        %562 = vmatprep.subr.mxu0 0.0
        %563 = vmatpush1.msra.mxu0 0.0
        %564 = vmatprep.subr.mxu0 0.0
        %565 = vmatpush1.msra.mxu0 0.0
        %566 = vmatprep.subr.mxu0 0.0
        %567 = vmatpush1.msra.mxu0 0.0
        %568 = vmatprep.subr.mxu0 0.0
        %569 = vmatpush1.msra.mxu0 0.0
        %570 = vmatprep.subr.mxu0 0.0
        %571 = vmatpush1.msra.mxu0 0.0
        %572 = vmatprep.subr.mxu0 0.0
        %573 = vmatpush1.msra.mxu0 0.0
        %574 = vmatprep.subr.mxu0 0.0
        %575 = vmatpush1.msra.mxu0 0.0
        %576 = vmatprep.subr.mxu0 0.0
        %577 = vmatpush1.msra.mxu0 0.0
        %578 = vmatprep.mubr.f32.mxu0 0.0
        %579 = vmatmul.mubr.f32.gmra.mrb[0].mxu0 %v512
        %v580 = vpop.f32.mrb[0].mxu0
        %v581 = vadd.f32 0.0, %v580
        %v582 = vpop.f32.mrb[0].mxu0
        %583 = vdwg.mxu0
        %v584 = vadd.f32 %v510, %v581
        %585 = vst.msk [vmem:[#allocation4] sm:$0xff] %vm399, %v584
        %586 = vst.msk [vmem:[#allocation2] sm:$0xff] %vm502, %v484
        %587 = vrot.lane.b32.xlu0 %v394, 120
        %v588 = vpop.permute.xlu0 %587
        %589 = vrot.lane.b32.xlu0 %v395, 120
        %v590 = vpop.permute.xlu0 %589
        %v591 = vsel %vm399, %v588, 0
        %v593 = vsel %vm399, %v590, 0
        %595 = vmatprep.subr.mxu0 0.0
        %596 = vmatpush1.xpose.msra.mxu0 %v593
        %597 = vmatprep.subr.mxu0 0.0
        %598 = vmatpush1.xpose.msra.mxu0 0.0
        %599 = vmatprep.subr.mxu0 0.0
        %600 = vmatpush1.xpose.msra.mxu0 0.0
        %601 = vmatprep.subr.mxu0 0.0
        %602 = vmatpush1.xpose.msra.mxu0 0.0
        %603 = vmatprep.subr.mxu0 0.0
        %604 = vmatpush1.xpose.msra.mxu0 0.0
        %605 = vmatprep.subr.mxu0 0.0
        %606 = vmatpush1.xpose.msra.mxu0 0.0
        %607 = vmatprep.subr.mxu0 0.0
        %608 = vmatpush1.xpose.msra.mxu0 0.0
        %609 = vmatprep.subr.mxu0 0.0
        %610 = vmatpush1.xpose.msra.mxu0 0.0
        %611 = vmatprep.subr.mxu0 0.0
        %612 = vmatpush1.xpose.msra.mxu0 0.0
        %613 = vmatprep.subr.mxu0 0.0
        %614 = vmatpush1.xpose.msra.mxu0 0.0
        %615 = vmatprep.subr.mxu0 0.0
        %616 = vmatpush1.xpose.msra.mxu0 0.0
        %617 = vmatprep.subr.mxu0 0.0
        %618 = vmatpush1.xpose.msra.mxu0 0.0
        %619 = vmatprep.subr.mxu0 0.0
        %620 = vmatpush1.xpose.msra.mxu0 0.0
        %621 = vmatprep.subr.mxu0 0.0
        %622 = vmatpush1.xpose.msra.mxu0 0.0
        %623 = vmatprep.subr.mxu0 0.0
        %624 = vmatpush1.xpose.msra.mxu0 0.0
        %625 = vmatprep.subr.mxu0 0.0
        %626 = vmatpush1.xpose.msra.mxu0 0.0
        %627 = vmatprep.subr.mxu0 0.0
        %628 = vmatpush1.xpose.msra.mxu0 0.0
        %629 = vmatprep.subr.mxu0 0.0
        %630 = vmatpush1.xpose.msra.mxu0 0.0
        %631 = vmatprep.subr.mxu0 0.0
        %632 = vmatpush1.xpose.msra.mxu0 0.0
        %633 = vmatprep.subr.mxu0 0.0
        %634 = vmatpush1.xpose.msra.mxu0 0.0
        %635 = vmatprep.subr.mxu0 0.0
        %636 = vmatpush1.xpose.msra.mxu0 0.0
        %637 = vmatprep.subr.mxu0 0.0
        %638 = vmatpush1.xpose.msra.mxu0 0.0
        %639 = vmatprep.subr.mxu0 0.0
        %640 = vmatpush1.xpose.msra.mxu0 0.0
        %641 = vmatprep.subr.mxu0 0.0
        %642 = vmatpush1.xpose.msra.mxu0 0.0
        %643 = vmatprep.subr.mxu0 0.0
        %644 = vmatpush1.xpose.msra.mxu0 0.0
        %645 = vmatprep.subr.mxu0 0.0
        %646 = vmatpush1.xpose.msra.mxu0 0.0
        %647 = vmatprep.subr.mxu0 0.0
        %648 = vmatpush1.xpose.msra.mxu0 0.0
        %649 = vmatprep.subr.mxu0 0.0
        %650 = vmatpush1.xpose.msra.mxu0 0.0
        %651 = vmatprep.subr.mxu0 0.0
        %652 = vmatpush1.xpose.msra.mxu0 0.0
        %653 = vmatprep.subr.mxu0 0.0
        %654 = vmatpush1.xpose.msra.mxu0 0.0
        %655 = vmatprep.subr.mxu0 0.0
        %656 = vmatpush1.xpose.msra.mxu0 0.0
        %657 = vmatprep.subr.mxu0 0.0
        %658 = vmatpush1.xpose.msra.mxu0 0.0
        %659 = vmatprep.mubr.f32.mxu0 0.0
        %660 = vmatmul.mubr.f32.gmra.mrb[0].mxu0 %v591
        %v661 = vpop.f32.mrb[0].mxu0
        %v662 = vadd.f32 0.0, %v661
        %v663 = vpop.f32.mrb[0].mxu0
        %664 = vdwg.mxu0
        %v665 = vsel %vm478, -1e-06, %v662
        %s666 = scalar_lea.vmem [#allocation2], 8
        %v667 = vld [vmem:[%s666] sm:$0xff]
        %v668 = vsel %vm399, %v665, -inf
        %669 = vmax.xlane.f32.xlu0 %v668
        %v670 = vpop.xlane.xlu0 %669
        %v671 = vmax.f32 %v667, %v670
        %v672 = vsub.f32 %v667, %v671
        %v673 = vmul.f32 %v672, 1.442695
        %v674 = vpow.pop %v673
        %676 = vset.pattern.permute.xlu0 0
        %677 = vperm.xlu0 %676, %v671
        %v678 = vpop.permute.xlu0 %677
        %v680 = vsub.f32 %v665, %v678
        %v681 = vmul.f32 %v680, 1.442695
        %v682 = vpow.pop %v681
        %s683 = scalar_lea.vmem [#allocation3], 8
        %v684 = vld [vmem:[%s683] sm:$0xff]
        %v685 = vmul.f32 %v674, %v684
        %v686 = vsel %vm399, %v682, 0.0
        %687 = vadd.xlane.f32.xlu0 %v686
        %v688 = vpop.xlane.xlu0 %687
        %v689 = vadd.f32 %v685, %v688
        %690 = vst.msk [vmem:[%s683] sm:$0xff] %vm502, %v689
        %s691 = scalar_lea.vmem [#allocation4], 8
        %v692 = vld [vmem:[%s691] sm:$0xff]
        %694 = vset.pattern.permute.xlu0 0
        %695 = vperm.xlu0 %694, %v674
        %v696 = vpop.permute.xlu0 %695
        %v698 = vmul.f32 %v696, %v692
        %700 = vrot.lane.b32.xlu0 %v396, 120
        %v701 = vpop.permute.xlu0 %700
        %v704 = vsel %vm399, %v682, 0
        %706 = vmatprep.subr.mxu0 0.0
        %707 = vmatpush1.msra.mxu0 %v701
        %708 = vmatprep.subr.mxu0 0.0
        %709 = vmatpush1.msra.mxu0 0.0
        %710 = vmatprep.subr.mxu0 0.0
        %711 = vmatpush1.msra.mxu0 0.0
        %712 = vmatprep.subr.mxu0 0.0
        %713 = vmatpush1.msra.mxu0 0.0
        %714 = vmatprep.subr.mxu0 0.0
        %715 = vmatpush1.msra.mxu0 0.0
        %716 = vmatprep.subr.mxu0 0.0
        %717 = vmatpush1.msra.mxu0 0.0
        %718 = vmatprep.subr.mxu0 0.0
        %719 = vmatpush1.msra.mxu0 0.0
        %720 = vmatprep.subr.mxu0 0.0
        %721 = vmatpush1.msra.mxu0 0.0
        %722 = vmatprep.subr.mxu0 0.0
        %723 = vmatpush1.msra.mxu0 0.0
        %724 = vmatprep.subr.mxu0 0.0
        %725 = vmatpush1.msra.mxu0 0.0
        %726 = vmatprep.subr.mxu0 0.0
        %727 = vmatpush1.msra.mxu0 0.0
        %728 = vmatprep.subr.mxu0 0.0
        %729 = vmatpush1.msra.mxu0 0.0
        %730 = vmatprep.subr.mxu0 0.0
        %731 = vmatpush1.msra.mxu0 0.0
        %732 = vmatprep.subr.mxu0 0.0
        %733 = vmatpush1.msra.mxu0 0.0
        %734 = vmatprep.subr.mxu0 0.0
        %735 = vmatpush1.msra.mxu0 0.0
        %736 = vmatprep.subr.mxu0 0.0
        %737 = vmatpush1.msra.mxu0 0.0
        %738 = vmatprep.subr.mxu0 0.0
        %739 = vmatpush1.msra.mxu0 0.0
        %740 = vmatprep.subr.mxu0 0.0
        %741 = vmatpush1.msra.mxu0 0.0
        %742 = vmatprep.subr.mxu0 0.0
        %743 = vmatpush1.msra.mxu0 0.0
        %744 = vmatprep.subr.mxu0 0.0
        %745 = vmatpush1.msra.mxu0 0.0
        %746 = vmatprep.subr.mxu0 0.0
        %747 = vmatpush1.msra.mxu0 0.0
        %748 = vmatprep.subr.mxu0 0.0
        %749 = vmatpush1.msra.mxu0 0.0
        %750 = vmatprep.subr.mxu0 0.0
        %751 = vmatpush1.msra.mxu0 0.0
        %752 = vmatprep.subr.mxu0 0.0
        %753 = vmatpush1.msra.mxu0 0.0
        %754 = vmatprep.subr.mxu0 0.0
        %755 = vmatpush1.msra.mxu0 0.0
        %756 = vmatprep.subr.mxu0 0.0
        %757 = vmatpush1.msra.mxu0 0.0
        %758 = vmatprep.subr.mxu0 0.0
        %759 = vmatpush1.msra.mxu0 0.0
        %760 = vmatprep.subr.mxu0 0.0
        %761 = vmatpush1.msra.mxu0 0.0
        %762 = vmatprep.subr.mxu0 0.0
        %763 = vmatpush1.msra.mxu0 0.0
        %764 = vmatprep.subr.mxu0 0.0
        %765 = vmatpush1.msra.mxu0 0.0
        %766 = vmatprep.subr.mxu0 0.0
        %767 = vmatpush1.msra.mxu0 0.0
        %768 = vmatprep.subr.mxu0 0.0
        %769 = vmatpush1.msra.mxu0 0.0
        %770 = vmatprep.mubr.f32.mxu0 0.0
        %771 = vmatmul.mubr.f32.gmra.mrb[0].mxu0 %v704
        %v772 = vpop.f32.mrb[0].mxu0
        %v773 = vadd.f32 0.0, %v772
        %v774 = vpop.f32.mrb[0].mxu0
        %775 = vdwg.mxu0
        %v776 = vadd.f32 %v698, %v773
        %777 = vst.msk [vmem:[%s691] sm:$0xff] %vm399, %v776
        %778 = vst.msk [vmem:[%s666] sm:$0xff] %vm502, %v671
        %779 = vrot.lane.b32.xlu0 %v394, 112
        %v780 = vpop.permute.xlu0 %779
        %781 = vrot.lane.b32.xlu0 %v395, 112
        %v782 = vpop.permute.xlu0 %781
        %v783 = vsel %vm399, %v780, 0
        %v785 = vsel %vm399, %v782, 0
        %787 = vmatprep.subr.mxu0 0.0
        %788 = vmatpush1.xpose.msra.mxu0 %v785
        %789 = vmatprep.subr.mxu0 0.0
        %790 = vmatpush1.xpose.msra.mxu0 0.0
        %791 = vmatprep.subr.mxu0 0.0
        %792 = vmatpush1.xpose.msra.mxu0 0.0
        %793 = vmatprep.subr.mxu0 0.0
        %794 = vmatpush1.xpose.msra.mxu0 0.0
        %795 = vmatprep.subr.mxu0 0.0
        %796 = vmatpush1.xpose.msra.mxu0 0.0
        %797 = vmatprep.subr.mxu0 0.0
        %798 = vmatpush1.xpose.msra.mxu0 0.0
        %799 = vmatprep.subr.mxu0 0.0
        %800 = vmatpush1.xpose.msra.mxu0 0.0
        %801 = vmatprep.subr.mxu0 0.0
        %802 = vmatpush1.xpose.msra.mxu0 0.0
        %803 = vmatprep.subr.mxu0 0.0
        %804 = vmatpush1.xpose.msra.mxu0 0.0
        %805 = vmatprep.subr.mxu0 0.0
        %806 = vmatpush1.xpose.msra.mxu0 0.0
        %807 = vmatprep.subr.mxu0 0.0
        %808 = vmatpush1.xpose.msra.mxu0 0.0
        %809 = vmatprep.subr.mxu0 0.0
        %810 = vmatpush1.xpose.msra.mxu0 0.0
        %811 = vmatprep.subr.mxu0 0.0
        %812 = vmatpush1.xpose.msra.mxu0 0.0
        %813 = vmatprep.subr.mxu0 0.0
        %814 = vmatpush1.xpose.msra.mxu0 0.0
        %815 = vmatprep.subr.mxu0 0.0
        %816 = vmatpush1.xpose.msra.mxu0 0.0
        %817 = vmatprep.subr.mxu0 0.0
        %818 = vmatpush1.xpose.msra.mxu0 0.0
        %819 = vmatprep.subr.mxu0 0.0
        %820 = vmatpush1.xpose.msra.mxu0 0.0
        %821 = vmatprep.subr.mxu0 0.0
        %822 = vmatpush1.xpose.msra.mxu0 0.0
        %823 = vmatprep.subr.mxu0 0.0
        %824 = vmatpush1.xpose.msra.mxu0 0.0
        %825 = vmatprep.subr.mxu0 0.0
        %826 = vmatpush1.xpose.msra.mxu0 0.0
        %827 = vmatprep.subr.mxu0 0.0
        %828 = vmatpush1.xpose.msra.mxu0 0.0
        %829 = vmatprep.subr.mxu0 0.0
        %830 = vmatpush1.xpose.msra.mxu0 0.0
        %831 = vmatprep.subr.mxu0 0.0
        %832 = vmatpush1.xpose.msra.mxu0 0.0
        %833 = vmatprep.subr.mxu0 0.0
        %834 = vmatpush1.xpose.msra.mxu0 0.0
        %835 = vmatprep.subr.mxu0 0.0
        %836 = vmatpush1.xpose.msra.mxu0 0.0
        %837 = vmatprep.subr.mxu0 0.0
        %838 = vmatpush1.xpose.msra.mxu0 0.0
        %839 = vmatprep.subr.mxu0 0.0
        %840 = vmatpush1.xpose.msra.mxu0 0.0
        %841 = vmatprep.subr.mxu0 0.0
        %842 = vmatpush1.xpose.msra.mxu0 0.0
        %843 = vmatprep.subr.mxu0 0.0
        %844 = vmatpush1.xpose.msra.mxu0 0.0
        %845 = vmatprep.subr.mxu0 0.0
        %846 = vmatpush1.xpose.msra.mxu0 0.0
        %847 = vmatprep.subr.mxu0 0.0
        %848 = vmatpush1.xpose.msra.mxu0 0.0
        %849 = vmatprep.subr.mxu0 0.0
        %850 = vmatpush1.xpose.msra.mxu0 0.0
        %851 = vmatprep.mubr.f32.mxu0 0.0
        %852 = vmatmul.mubr.f32.gmra.mrb[0].mxu0 %v783
        %v853 = vpop.f32.mrb[0].mxu0
        %v854 = vadd.f32 0.0, %v853
        %v855 = vpop.f32.mrb[0].mxu0
        %856 = vdwg.mxu0
        %v857 = vsel %vm478, -1e-06, %v854
        %s858 = scalar_lea.vmem [#allocation2], 16
        %v859 = vld [vmem:[%s858] sm:$0xff]
        %v860 = vsel %vm399, %v857, -inf
        %861 = vmax.xlane.f32.xlu0 %v860
        %v862 = vpop.xlane.xlu0 %861
        %v863 = vmax.f32 %v859, %v862
        %v864 = vsub.f32 %v859, %v863
        %v865 = vmul.f32 %v864, 1.442695
        %v866 = vpow.pop %v865
        %868 = vset.pattern.permute.xlu0 0
        %869 = vperm.xlu0 %868, %v863
        %v870 = vpop.permute.xlu0 %869
        %v872 = vsub.f32 %v857, %v870
        %v873 = vmul.f32 %v872, 1.442695
        %v874 = vpow.pop %v873
        %s875 = scalar_lea.vmem [#allocation3], 16
        %v876 = vld [vmem:[%s875] sm:$0xff]
        %v877 = vmul.f32 %v866, %v876
        %v878 = vsel %vm399, %v874, 0.0
        %879 = vadd.xlane.f32.xlu0 %v878
        %v880 = vpop.xlane.xlu0 %879
        %v881 = vadd.f32 %v877, %v880
        %882 = vst.msk [vmem:[%s875] sm:$0xff] %vm502, %v881
        %s883 = scalar_lea.vmem [#allocation4], 16
        %v884 = vld [vmem:[%s883] sm:$0xff]
        %886 = vset.pattern.permute.xlu0 0
        %887 = vperm.xlu0 %886, %v866
        %v888 = vpop.permute.xlu0 %887
        %v890 = vmul.f32 %v888, %v884
        %891 = vrot.lane.b32.xlu0 %v396, 112
        %v892 = vpop.permute.xlu0 %891
        %v895 = vsel %vm399, %v874, 0
        %897 = vmatprep.subr.mxu0 0.0
        %898 = vmatpush1.msra.mxu0 %v892
        %899 = vmatprep.subr.mxu0 0.0
        %900 = vmatpush1.msra.mxu0 0.0
        %901 = vmatprep.subr.mxu0 0.0
        %902 = vmatpush1.msra.mxu0 0.0
        %903 = vmatprep.subr.mxu0 0.0
        %904 = vmatpush1.msra.mxu0 0.0
        %905 = vmatprep.subr.mxu0 0.0
        %906 = vmatpush1.msra.mxu0 0.0
        %907 = vmatprep.subr.mxu0 0.0
        %908 = vmatpush1.msra.mxu0 0.0
        %909 = vmatprep.subr.mxu0 0.0
        %910 = vmatpush1.msra.mxu0 0.0
        %911 = vmatprep.subr.mxu0 0.0
        %912 = vmatpush1.msra.mxu0 0.0
        %913 = vmatprep.subr.mxu0 0.0
        %914 = vmatpush1.msra.mxu0 0.0
        %915 = vmatprep.subr.mxu0 0.0
        %916 = vmatpush1.msra.mxu0 0.0
        %917 = vmatprep.subr.mxu0 0.0
        %918 = vmatpush1.msra.mxu0 0.0
        %919 = vmatprep.subr.mxu0 0.0
        %920 = vmatpush1.msra.mxu0 0.0
        %921 = vmatprep.subr.mxu0 0.0
        %922 = vmatpush1.msra.mxu0 0.0
        %923 = vmatprep.subr.mxu0 0.0
        %924 = vmatpush1.msra.mxu0 0.0
        %925 = vmatprep.subr.mxu0 0.0
        %926 = vmatpush1.msra.mxu0 0.0
        %927 = vmatprep.subr.mxu0 0.0
        %928 = vmatpush1.msra.mxu0 0.0
        %929 = vmatprep.subr.mxu0 0.0
        %930 = vmatpush1.msra.mxu0 0.0
        %931 = vmatprep.subr.mxu0 0.0
        %932 = vmatpush1.msra.mxu0 0.0
        %933 = vmatprep.subr.mxu0 0.0
        %934 = vmatpush1.msra.mxu0 0.0
        %935 = vmatprep.subr.mxu0 0.0
        %936 = vmatpush1.msra.mxu0 0.0
        %937 = vmatprep.subr.mxu0 0.0
        %938 = vmatpush1.msra.mxu0 0.0
        %939 = vmatprep.subr.mxu0 0.0
        %940 = vmatpush1.msra.mxu0 0.0
        %941 = vmatprep.subr.mxu0 0.0
        %942 = vmatpush1.msra.mxu0 0.0
        %943 = vmatprep.subr.mxu0 0.0
        %944 = vmatpush1.msra.mxu0 0.0
        %945 = vmatprep.subr.mxu0 0.0
        %946 = vmatpush1.msra.mxu0 0.0
        %947 = vmatprep.subr.mxu0 0.0
        %948 = vmatpush1.msra.mxu0 0.0
        %949 = vmatprep.subr.mxu0 0.0
        %950 = vmatpush1.msra.mxu0 0.0
        %951 = vmatprep.subr.mxu0 0.0
        %952 = vmatpush1.msra.mxu0 0.0
        %953 = vmatprep.subr.mxu0 0.0
        %954 = vmatpush1.msra.mxu0 0.0
        %955 = vmatprep.subr.mxu0 0.0
        %956 = vmatpush1.msra.mxu0 0.0
        %957 = vmatprep.subr.mxu0 0.0
        %958 = vmatpush1.msra.mxu0 0.0
        %959 = vmatprep.subr.mxu0 0.0
        %960 = vmatpush1.msra.mxu0 0.0
        %961 = vmatprep.mubr.f32.mxu0 0.0
        %962 = vmatmul.mubr.f32.gmra.mrb[0].mxu0 %v895
        %v963 = vpop.f32.mrb[0].mxu0
        %v964 = vadd.f32 0.0, %v963
        %v965 = vpop.f32.mrb[0].mxu0
        %966 = vdwg.mxu0
        %v967 = vadd.f32 %v890, %v964
        %968 = vst.msk [vmem:[%s883] sm:$0xff] %vm399, %v967
        %969 = vst.msk [vmem:[%s858] sm:$0xff] %vm502, %v863
        %970 = vrot.lane.b32.xlu0 %v394, 104
        %v971 = vpop.permute.xlu0 %970
        %972 = vrot.lane.b32.xlu0 %v395, 104
        %v973 = vpop.permute.xlu0 %972
        %v974 = vsel %vm399, %v971, 0
        %v976 = vsel %vm399, %v973, 0
        %978 = vmatprep.subr.mxu0 0.0
        %979 = vmatpush1.xpose.msra.mxu0 %v976
        %980 = vmatprep.subr.mxu0 0.0
        %981 = vmatpush1.xpose.msra.mxu0 0.0
        %982 = vmatprep.subr.mxu0 0.0
        %983 = vmatpush1.xpose.msra.mxu0 0.0
        %984 = vmatprep.subr.mxu0 0.0
        %985 = vmatpush1.xpose.msra.mxu0 0.0
        %986 = vmatprep.subr.mxu0 0.0
        %987 = vmatpush1.xpose.msra.mxu0 0.0
        %988 = vmatprep.subr.mxu0 0.0
        %989 = vmatpush1.xpose.msra.mxu0 0.0
        %990 = vmatprep.subr.mxu0 0.0
        %991 = vmatpush1.xpose.msra.mxu0 0.0
        %992 = vmatprep.subr.mxu0 0.0
        %993 = vmatpush1.xpose.msra.mxu0 0.0
        %994 = vmatprep.subr.mxu0 0.0
        %995 = vmatpush1.xpose.msra.mxu0 0.0
        %996 = vmatprep.subr.mxu0 0.0
        %997 = vmatpush1.xpose.msra.mxu0 0.0
        %998 = vmatprep.subr.mxu0 0.0
        %999 = vmatpush1.xpose.msra.mxu0 0.0
        %1000 = vmatprep.subr.mxu0 0.0
        %1001 = vmatpush1.xpose.msra.mxu0 0.0
        %1002 = vmatprep.subr.mxu0 0.0
        %1003 = vmatpush1.xpose.msra.mxu0 0.0
        %1004 = vmatprep.subr.mxu0 0.0
        %1005 = vmatpush1.xpose.msra.mxu0 0.0
        %1006 = vmatprep.subr.mxu0 0.0
        %1007 = vmatpush1.xpose.msra.mxu0 0.0
        %1008 = vmatprep.subr.mxu0 0.0
        %1009 = vmatpush1.xpose.msra.mxu0 0.0
        %1010 = vmatprep.subr.mxu0 0.0
        %1011 = vmatpush1.xpose.msra.mxu0 0.0
        %1012 = vmatprep.subr.mxu0 0.0
        %1013 = vmatpush1.xpose.msra.mxu0 0.0
        %1014 = vmatprep.subr.mxu0 0.0
        %1015 = vmatpush1.xpose.msra.mxu0 0.0
        %1016 = vmatprep.subr.mxu0 0.0
        %1017 = vmatpush1.xpose.msra.mxu0 0.0
        %1018 = vmatprep.subr.mxu0 0.0
        %1019 = vmatpush1.xpose.msra.mxu0 0.0
        %1020 = vmatprep.subr.mxu0 0.0
        %1021 = vmatpush1.xpose.msra.mxu0 0.0
        %1022 = vmatprep.subr.mxu0 0.0
        %1023 = vmatpush1.xpose.msra.mxu0 0.0
        %1024 = vmatprep.subr.mxu0 0.0
        %1025 = vmatpush1.xpose.msra.mxu0 0.0
        %1026 = vmatprep.subr.mxu0 0.0
        %1027 = vmatpush1.xpose.msra.mxu0 0.0
        %1028 = vmatprep.subr.mxu0 0.0
        %1029 = vmatpush1.xpose.msra.mxu0 0.0
        %1030 = vmatprep.subr.mxu0 0.0
        %1031 = vmatpush1.xpose.msra.mxu0 0.0
        %1032 = vmatprep.subr.mxu0 0.0
        %1033 = vmatpush1.xpose.msra.mxu0 0.0
        %1034 = vmatprep.subr.mxu0 0.0
        %1035 = vmatpush1.xpose.msra.mxu0 0.0
        %1036 = vmatprep.subr.mxu0 0.0
        %1037 = vmatpush1.xpose.msra.mxu0 0.0
        %1038 = vmatprep.subr.mxu0 0.0
        %1039 = vmatpush1.xpose.msra.mxu0 0.0
        %1040 = vmatprep.subr.mxu0 0.0
        %1041 = vmatpush1.xpose.msra.mxu0 0.0
        %1042 = vmatprep.mubr.f32.mxu0 0.0
        %1043 = vmatmul.mubr.f32.gmra.mrb[0].mxu0 %v974
        %v1044 = vpop.f32.mrb[0].mxu0
        %v1045 = vadd.f32 0.0, %v1044
        %v1046 = vpop.f32.mrb[0].mxu0
        %1047 = vdwg.mxu0
        %v1048 = vsel %vm478, -1e-06, %v1045
        %s1049 = scalar_lea.vmem [#allocation2], 24
        %v1050 = vld [vmem:[%s1049] sm:$0xff]
        %v1051 = vsel %vm399, %v1048, -inf
        %1052 = vmax.xlane.f32.xlu0 %v1051
        %v1053 = vpop.xlane.xlu0 %1052
        %v1054 = vmax.f32 %v1050, %v1053
        %v1055 = vsub.f32 %v1050, %v1054
        %v1056 = vmul.f32 %v1055, 1.442695
        %v1057 = vpow.pop %v1056
        %1059 = vset.pattern.permute.xlu0 0
        %1060 = vperm.xlu0 %1059, %v1054
        %v1061 = vpop.permute.xlu0 %1060
        %v1063 = vsub.f32 %v1048, %v1061
        %v1064 = vmul.f32 %v1063, 1.442695
        %v1065 = vpow.pop %v1064
        %s1066 = scalar_lea.vmem [#allocation3], 24
        %v1067 = vld [vmem:[%s1066] sm:$0xff]
        %v1068 = vmul.f32 %v1057, %v1067
        %v1069 = vsel %vm399, %v1065, 0.0
        %1070 = vadd.xlane.f32.xlu0 %v1069
        %v1071 = vpop.xlane.xlu0 %1070
        %v1072 = vadd.f32 %v1068, %v1071
        %1073 = vst.msk [vmem:[%s1066] sm:$0xff] %vm502, %v1072
        %s1074 = scalar_lea.vmem [#allocation4], 24
        %v1075 = vld [vmem:[%s1074] sm:$0xff]
        %1077 = vset.pattern.permute.xlu0 0
        %1078 = vperm.xlu0 %1077, %v1057
        %v1079 = vpop.permute.xlu0 %1078
        %v1081 = vmul.f32 %v1079, %v1075
        %1082 = vrot.lane.b32.xlu0 %v396, 104
        %v1083 = vpop.permute.xlu0 %1082
        %v1086 = vsel %vm399, %v1065, 0
        %1088 = vmatprep.subr.mxu0 0.0
        %1089 = vmatpush1.msra.mxu0 %v1083
        %1090 = vmatprep.subr.mxu0 0.0
        %1091 = vmatpush1.msra.mxu0 0.0
        %1092 = vmatprep.subr.mxu0 0.0
        %1093 = vmatpush1.msra.mxu0 0.0
        %1094 = vmatprep.subr.mxu0 0.0
        %1095 = vmatpush1.msra.mxu0 0.0
        %1096 = vmatprep.subr.mxu0 0.0
        %1097 = vmatpush1.msra.mxu0 0.0
        %1098 = vmatprep.subr.mxu0 0.0
        %1099 = vmatpush1.msra.mxu0 0.0
        %1100 = vmatprep.subr.mxu0 0.0
        %1101 = vmatpush1.msra.mxu0 0.0
        %1102 = vmatprep.subr.mxu0 0.0
        %1103 = vmatpush1.msra.mxu0 0.0
        %1104 = vmatprep.subr.mxu0 0.0
        %1105 = vmatpush1.msra.mxu0 0.0
        %1106 = vmatprep.subr.mxu0 0.0
        %1107 = vmatpush1.msra.mxu0 0.0
        %1108 = vmatprep.subr.mxu0 0.0
        %1109 = vmatpush1.msra.mxu0 0.0
        %1110 = vmatprep.subr.mxu0 0.0
        %1111 = vmatpush1.msra.mxu0 0.0
        %1112 = vmatprep.subr.mxu0 0.0
        %1113 = vmatpush1.msra.mxu0 0.0
        %1114 = vmatprep.subr.mxu0 0.0
        %1115 = vmatpush1.msra.mxu0 0.0
        %1116 = vmatprep.subr.mxu0 0.0
        %1117 = vmatpush1.msra.mxu0 0.0
        %1118 = vmatprep.subr.mxu0 0.0
        %1119 = vmatpush1.msra.mxu0 0.0
        %1120 = vmatprep.subr.mxu0 0.0
        %1121 = vmatpush1.msra.mxu0 0.0
        %1122 = vmatprep.subr.mxu0 0.0
        %1123 = vmatpush1.msra.mxu0 0.0
        %1124 = vmatprep.subr.mxu0 0.0
        %1125 = vmatpush1.msra.mxu0 0.0
        %1126 = vmatprep.subr.mxu0 0.0
        %1127 = vmatpush1.msra.mxu0 0.0
        %1128 = vmatprep.subr.mxu0 0.0
        %1129 = vmatpush1.msra.mxu0 0.0
        %1130 = vmatprep.subr.mxu0 0.0
        %1131 = vmatpush1.msra.mxu0 0.0
        %1132 = vmatprep.subr.mxu0 0.0
        %1133 = vmatpush1.msra.mxu0 0.0
        %1134 = vmatprep.subr.mxu0 0.0
        %1135 = vmatpush1.msra.mxu0 0.0
        %1136 = vmatprep.subr.mxu0 0.0
        %1137 = vmatpush1.msra.mxu0 0.0
        %1138 = vmatprep.subr.mxu0 0.0
        %1139 = vmatpush1.msra.mxu0 0.0
        %1140 = vmatprep.subr.mxu0 0.0
        %1141 = vmatpush1.msra.mxu0 0.0
        %1142 = vmatprep.subr.mxu0 0.0
        %1143 = vmatpush1.msra.mxu0 0.0
        %1144 = vmatprep.subr.mxu0 0.0
        %1145 = vmatpush1.msra.mxu0 0.0
        %1146 = vmatprep.subr.mxu0 0.0
        %1147 = vmatpush1.msra.mxu0 0.0
        %1148 = vmatprep.subr.mxu0 0.0
        %1149 = vmatpush1.msra.mxu0 0.0
        %1150 = vmatprep.subr.mxu0 0.0
        %1151 = vmatpush1.msra.mxu0 0.0
        %1152 = vmatprep.mubr.f32.mxu0 0.0
        %1153 = vmatmul.mubr.f32.gmra.mrb[0].mxu0 %v1086
        %v1154 = vpop.f32.mrb[0].mxu0
        %v1155 = vadd.f32 0.0, %v1154
        %v1156 = vpop.f32.mrb[0].mxu0
        %1157 = vdwg.mxu0
        %v1158 = vadd.f32 %v1081, %v1155
        %1159 = vst.msk [vmem:[%s1074] sm:$0xff] %vm399, %v1158
        %1160 = vst.msk [vmem:[%s1049] sm:$0xff] %vm502, %v1054
        // Predicated region
        $region49: #{multi_head_attention.3} parent=43 // pred_check
          %p1161 = pneg %p376
        $region50: #{multi_head_attention.3} parent=43 // pred_check_branch
          %1163 = sbr.rel (%p1161) target = $region52
        $region51: #{multi_head_attention.3} parent=43 // pred_region
          %v1164 = vld [vmem:[#allocation3] sm:$0xff]
          %v1165 = vrcp.pop %v1164
          %v1166 = vld [vmem:[#allocation4] sm:$0xff]
          %1168 = vset.pattern.permute.xlu0 0
          %1169 = vperm.xlu0 %1168, %v1165
          %v1170 = vpop.permute.xlu0 %1169
          %v1172 = vmul.f32 %v1166, %v1170
          %1173 = vst.msk [vmem:[#allocation5] sm:$0xff] %vm399, %v1172
          %v1174 = vld [vmem:[%s683] sm:$0xff]
          %v1175 = vrcp.pop %v1174
          %v1176 = vld [vmem:[%s691] sm:$0xff]
          %1178 = vset.pattern.permute.xlu0 0
          %1179 = vperm.xlu0 %1178, %v1175
          %v1180 = vpop.permute.xlu0 %1179
          %v1182 = vmul.f32 %v1176, %v1180
          %1184 = vrot.lane.b32.xlu0 %v1182, 8
          %v1185 = vpop.permute.xlu0 %1184
          %vm1187 = vcmask 130112
          %1188 = vst.msk [vmem:[#allocation5] sm:$0xff] %vm1187, %v1185
          %v1189 = vld [vmem:[%s875] sm:$0xff]
          %v1190 = vrcp.pop %v1189
          %v1191 = vld [vmem:[%s883] sm:$0xff]
          %1193 = vset.pattern.permute.xlu0 0
          %1194 = vperm.xlu0 %1193, %v1190
          %v1195 = vpop.permute.xlu0 %1194
          %v1197 = vmul.f32 %v1191, %v1195
          %1199 = vrot.lane.b32.xlu0 %v1197, 16
          %v1200 = vpop.permute.xlu0 %1199
          %vm1202 = vcmask 195712
          %1203 = vst.msk [vmem:[#allocation5] sm:$0xff] %vm1202, %v1200
          %v1204 = vld [vmem:[%s1066] sm:$0xff]
          %v1205 = vrcp.pop %v1204
          %v1206 = vld [vmem:[%s1074] sm:$0xff]
          %1208 = vset.pattern.permute.xlu0 0
          %1209 = vperm.xlu0 %1208, %v1205
          %v1210 = vpop.permute.xlu0 %1209
          %v1212 = vmul.f32 %v1206, %v1210
          %1214 = vrot.lane.b32.xlu0 %v1212, 24
          %v1215 = vpop.permute.xlu0 %1214
          %vm1217 = vcmask 261312
          %1218 = vst.msk [vmem:[#allocation5] sm:$0xff] %vm1217, %v1215
          %v1219 = vld [vmem:[#allocation5] sm:$0xff]
          %v1220 = vld [vmem:[%s4] sm:$0xff]
          %v1221 = vld [vmem:[%s4 + $0x8] sm:$0xff]
          %v1222 = vld [vmem:[%s4 + $0x10] sm:$0xff]
          %v1223 = vld [vmem:[%s4 + $0x18] sm:$0xff]
          %v1224 = vld [vmem:[%s5] sm:$0x1]
          %v1226 = vlaneseq
          %v1227 = vshrl.u32 %v1226, 7
          %v1228 = vsub.s32 0, %v1227
          %v1229 = vrot.slane %v1224, %v1228
          %vm1231 = vcmask 261120
          %v1233 = vsel %vm1231, %v1219, 0
          %1235 = vmatprep.subr.mxu0 0.0
          %1236 = vmatpush1.msra.mxu0 %v1220
          %1237 = vmatprep.subr.mxu0 0.0
          %1238 = vmatpush1.msra.mxu0 %v1221
          %1239 = vmatprep.subr.mxu0 0.0
          %1240 = vmatpush1.msra.mxu0 %v1222
          %1241 = vmatprep.subr.mxu0 0.0
          %1242 = vmatpush1.msra.mxu0 %v1223
          %1243 = vmatprep.subr.mxu0 0.0
          %1244 = vmatpush1.msra.mxu0 0.0
          %1245 = vmatprep.subr.mxu0 0.0
          %1246 = vmatpush1.msra.mxu0 0.0
          %1247 = vmatprep.subr.mxu0 0.0
          %1248 = vmatpush1.msra.mxu0 0.0
          %1249 = vmatprep.subr.mxu0 0.0
          %1250 = vmatpush1.msra.mxu0 0.0
          %1251 = vmatprep.subr.mxu0 0.0
          %1252 = vmatpush1.msra.mxu0 0.0
          %1253 = vmatprep.subr.mxu0 0.0
          %1254 = vmatpush1.msra.mxu0 0.0
          %1255 = vmatprep.subr.mxu0 0.0
          %1256 = vmatpush1.msra.mxu0 0.0
          %1257 = vmatprep.subr.mxu0 0.0
          %1258 = vmatpush1.msra.mxu0 0.0
          %1259 = vmatprep.subr.mxu0 0.0
          %1260 = vmatpush1.msra.mxu0 0.0
          %1261 = vmatprep.subr.mxu0 0.0
          %1262 = vmatpush1.msra.mxu0 0.0
          %1263 = vmatprep.subr.mxu0 0.0
          %1264 = vmatpush1.msra.mxu0 0.0
          %1265 = vmatprep.subr.mxu0 0.0
          %1266 = vmatpush1.msra.mxu0 0.0
          %1267 = vmatprep.subr.mxu0 0.0
          %1268 = vmatpush1.msra.mxu0 0.0
          %1269 = vmatprep.subr.mxu0 0.0
          %1270 = vmatpush1.msra.mxu0 0.0
          %1271 = vmatprep.subr.mxu0 0.0
          %1272 = vmatpush1.msra.mxu0 0.0
          %1273 = vmatprep.subr.mxu0 0.0
          %1274 = vmatpush1.msra.mxu0 0.0
          %1275 = vmatprep.subr.mxu0 0.0
          %1276 = vmatpush1.msra.mxu0 0.0
          %1277 = vmatprep.subr.mxu0 0.0
          %1278 = vmatpush1.msra.mxu0 0.0
          %1279 = vmatprep.subr.mxu0 0.0
          %1280 = vmatpush1.msra.mxu0 0.0
          %1281 = vmatprep.subr.mxu0 0.0
          %1282 = vmatpush1.msra.mxu0 0.0
          %1283 = vmatprep.subr.mxu0 0.0
          %1284 = vmatpush1.msra.mxu0 0.0
          %1285 = vmatprep.subr.mxu0 0.0
          %1286 = vmatpush1.msra.mxu0 0.0
          %1287 = vmatprep.subr.mxu0 0.0
          %1288 = vmatpush1.msra.mxu0 0.0
          %1289 = vmatprep.subr.mxu0 0.0
          %1290 = vmatpush1.msra.mxu0 0.0
          %1291 = vmatprep.subr.mxu0 0.0
          %1292 = vmatpush1.msra.mxu0 0.0
          %1293 = vmatprep.subr.mxu0 0.0
          %1294 = vmatpush1.msra.mxu0 0.0
          %1295 = vmatprep.subr.mxu0 0.0
          %1296 = vmatpush1.msra.mxu0 0.0
          %1297 = vmatprep.subr.mxu0 0.0
          %1298 = vmatpush1.msra.mxu0 0.0
          %1299 = vmatprep.mubr.f32.mxu0 0.0
          %1300 = vmatmul.mubr.f32.gmra.mrb[0].mxu0 %v1233
          %v1301 = vpop.f32.mrb[0].mxu0
          %v1302 = vadd.f32 %v1229, %v1301
          %v1303 = vpop.f32.mrb[0].mxu0
          %1304 = vdwg.mxu0
          %1305 = vst.msk [vmem:[%s342] sm:$0xff] %vm1231, %v1302
        $region52: #{multi_head_attention.3} parent=43 // pred_fallthru
          _
        %s1306 = sand.u32 %s205, 1
        %s1307 = scalar_lea.sflag [#allocation7], %s1306
        %s1308 = sand.u32 %s205, 1
        %s1309 = smul.addr %s1308, 8
        %s1310 = scalar_lea.vmem [#allocation6], %s1309
        // Predicated region
        $region53: #{multi_head_attention.3} parent=43 // pred_check
          %p1311 = pneg %p215
        $region54: #{multi_head_attention.3} parent=43 // pred_check_branch
          %1313 = sbr.rel (%p1311) target = $region56
        $region55: #{multi_head_attention.3} parent=43 // pred_region
          %s1315 = ssub.s32 128, 128
          %1316 = vsyncadd %s1307, %s1315
          %s1317 = sadd.s32 %s26, %s25
          %s1318 = smul.addr %s1317, 128
          %s1319 = scalar_lea.hbm %s6, %s1318
          %s1321 = sshll.u32 %s1310, 4
          %s1322 = int_to_ptr.vmem [resolvable:$true] %s1321
          %1324 = dma.vmem_to_hbm [thread:$0]  %s1322, 128, %s1319, %s1307
        $region56: #{multi_head_attention.3} parent=43 // pred_fallthru
          _
      $region44: #{multi_head_attention.3} parent=5 // pred_fallthru
        _
      %p1325 = scmp.le.s32.totalorder 2, %s15
      // Predicated region
      $region57: #{multi_head_attention.3} parent=5 // pred_check
        %p1326 = pneg %p1325
      $region58: #{multi_head_attention.3} parent=5 // pred_check_branch
        %1328 = sbr.rel (%p1326) target = $region60
      $region59: #{multi_head_attention.3} parent=5 // pred_region
        %s1329 = ssub.s32 %s15, 2
        // Predicated region
        $region61: #{multi_head_attention.3} parent=59 // pred_check
          %p1330 = pneg %p221
        $region62: #{multi_head_attention.3} parent=59 // pred_check_branch
          %1332 = sbr.rel (%p1330) target = $region64
        $region63: #{multi_head_attention.3} parent=59 // pred_region
          %s1333 = sand.u32 %s206, 1
          %s1334 = scalar_lea.sflag [#allocation7], %s1333
          %s1335 = sand.u32 %s206, 1
          %s1336 = smul.addr %s1335, 8
          %s1337 = scalar_lea.vmem [#allocation6], %s1336
          %1338 = dma.done %s1334, 128
        $region64: #{multi_head_attention.3} parent=59 // pred_fallthru
          _
      $region60: #{multi_head_attention.3} parent=5 // pred_fallthru
        _
    $region6: #{multi_head_attention.3} parent=1 // loop_footer
      %s19 = sadd.s32 1, %s15
    $region7: #{multi_head_attention.3} parent=1 // loop_footer_branch
      %14 = sbr.rel target = $region3
    $region8: #{multi_head_attention.3} parent=1 // loop_exit
      _
    %1339 = vsyncpa [#allocation7], 1
    %s1340 = scalar_lea.sflag [#allocation7], 1
    %1341 = vsyncpa %s1340, 1

</llo_original>
